<compile_context>
chip_gen: v7x
topology: tpu7x:2x2x1
jax: 0.10.0
libtpu: 0.0.40
codegen_flags: <defaults>
</compile_context>

<pallas_src>
import jax
import jax.numpy as jnp
from jax.experimental import pallas as pl
from jax.experimental.pallas import tpu as pltpu

STATE_DIM = 5
ACTION_DIM = 1
IN_DIM = STATE_DIM + ACTION_DIM  # 6
HID = 64
OUT_DIM = 1
MAX_TB = 2048  # upper bound on the batch tile (lane axis)


def _round_up(x, m):
    return ((x + m - 1) // m) * m


def _num_tensorcores():
    # v7x has 2 TensorCores per chip (shared via megacore / "parallel"
    # dimension semantics); v5e / v6e have 1.  Be defensive: never crash.
    try:
        kind = jax.devices()[0].device_kind.lower()
    except Exception:
        return 1
    return 2 if ("v7" in kind or "7x" in kind) else 1


def _choose_tb(batch, max_tb=MAX_TB):
    # One tile per TensorCore when possible: grid steps are a serial loop on
    # single-TC chips, so extra steps are pure ~0.35us overhead there.
    max_tb = max(128, (int(max_tb) // 128) * 128)
    ncores = _num_tensorcores()
    quantum = 256 if ncores > 1 else 128  # keep per-TC tiles large on v7x
    tb = _round_up(pl.cdiv(max(int(batch), 1), ncores), quantum)
    return int(min(max_tb, max(tb, 128)))


def _softplus(x):
    # Matches torch.nn.functional.softplus(beta=1, threshold=20):
    # returns x for x > 20, else log(1 + exp(x)).
    safe = jnp.minimum(x, 20.0)
    return jnp.where(x > 20.0, x, jnp.log1p(jnp.exp(safe)))


def critic_kernel(s_ref, a_ref, w1s_ref, w1a_ref, b1_ref,
                  w2_ref, b2_ref, w3_ref, b3_ref, w4_ref, b4_ref, out_ref):
    s = s_ref[...]                                    # (5, TB)  f32
    a = a_ref[...]                                    # (1, TB)  f32

    # fc1: state part on the MXU (K=5, trivial cost -> keep f32), action part
    # as a VPU rank-1 broadcast-mul, bias broadcast along lanes.
    h = jnp.dot(w1s_ref[...], s, preferred_element_type=jnp.float32)  # (64,TB)
    h = _softplus(h + w1a_ref[...] * a + b1_ref[...])                 # f32

    # fc2 / fc3: bf16 operands on the MXU (single-pass), f32 accumulate,
    # f32 softplus (works on v5e too).
    h = _softplus(jnp.dot(w2_ref[...], h.astype(jnp.bfloat16),
                          preferred_element_type=jnp.float32) + b2_ref[...])
    h = _softplus(jnp.dot(w3_ref[...], h.astype(jnp.bfloat16),
                          preferred_element_type=jnp.float32) + b3_ref[...])

    # fc4: (1,64) @ (64,TB) -> (1,TB): output already lane-dense, unmasked store.
    q = jnp.dot(w4_ref[...], h.astype(jnp.bfloat16),
                preferred_element_type=jnp.float32) + b4_ref[...]
    out_ref[...] = q.astype(out_ref.dtype)            # (1, TB)


def critic_forward(state, action, params, *, max_tb=MAX_TB):
    """state: [B, 5], action: [B, 1] -> q: [B, 1]"""
    state = jnp.asarray(state, jnp.float32).reshape(-1, STATE_DIM)
    action = jnp.asarray(action, jnp.float32).reshape(-1, ACTION_DIM)
    B = state.shape[0]

    tb = _choose_tb(B, max_tb)
    grid = int(pl.cdiv(B, tb))
    b_pad = grid * tb  # only the OUTPUT is padded; inputs use partial blocks

    w1s, w1a, b1, w2, b2, w3, b3, w4, b4 = params
    # Resident weights: cast the MXU operands once to bf16 (single-pass MXU);
    # biases and the tiny fc1 path stay f32.
    w2 = w2.astype(jnp.bfloat16)
    w3 = w3.astype(jnp.bfloat16)
    w4 = w4.astype(jnp.bfloat16)

    # Transposed, lane-dense inputs: (5, B) and (1, B).
    state_t = state.T
    action_t = action.T

    def resident(shape):
        # Full-extent block, constant block index -> stays in VMEM, no re-DMA.
        return pl.BlockSpec(shape, lambda i: (0, 0))

    grid_spec = pltpu.PrefetchScalarGridSpec(
        num_scalar_prefetch=0,
        grid=(grid,),
        in_specs=[
            pl.BlockSpec((STATE_DIM, tb), lambda i: (0, i)),    # state tile
            pl.BlockSpec((ACTION_DIM, tb), lambda i: (0, i)),   # action tile
            resident((HID, STATE_DIM)),    # fc1 W, state cols   (64, 5)  f32
            resident((HID, ACTION_DIM)),   # fc1 W, action col   (64, 1)  f32
            resident((HID, 1)),            # fc1 bias
            resident((HID, HID)), resident((HID, 1)),           # fc2 (bf16 W)
            resident((HID, HID)), resident((HID, 1)),           # fc3 (bf16 W)
            resident((OUT_DIM, HID)),      # fc4 W (1, 64) bf16
            resident((OUT_DIM, 1)),        # fc4 bias
        ],
        out_specs=pl.BlockSpec((OUT_DIM, tb), lambda i: (0, i)),
    )

    q_t = pl.pallas_call(
        critic_kernel,
        out_shape=jax.ShapeDtypeStruct((OUT_DIM, b_pad), jnp.float32),
        grid_spec=grid_spec,
        compiler_params=pltpu.CompilerParams(
            dimension_semantics=("parallel",)),
    )(state_t, action_t, w1s, w1a, b1, w2, b2, w3, b3, w4, b4)

    return q_t[0, :B].reshape(B, OUT_DIM)


def init_params(key):
    """Deterministic init mimicking PyTorch nn.Linear defaults
    (uniform +/- 1/sqrt(fan_in)).  All weights are stored in torch's
    [out, in] layout (pre-transposed for the (HID, TB) dataflow); fc1's
    weight is split into a (64, 5) state part and a (64, 1) action column;
    biases are stored as (out, 1) columns."""
    params = []

    # fc1
    key, kw, kb = jax.random.split(key, 3)
    bound = 1.0 / jnp.sqrt(float(IN_DIM))
    w1 = jax.random.uniform(kw, (HID, IN_DIM), jnp.float32,
                            minval=-bound, maxval=bound)
    b1 = jax.random.uniform(kb, (HID, 1), jnp.float32,
                            minval=-bound, maxval=bound)
    params += [w1[:, :STATE_DIM], w1[:, STATE_DIM:], b1]

    # fc2, fc3
    for _ in range(2):
        key, kw, kb = jax.random.split(key, 3)
        bound = 1.0 / jnp.sqrt(float(HID))
        params += [
            jax.random.uniform(kw, (HID, HID), jnp.float32,
                               minval=-bound, maxval=bound),
            jax.random.uniform(kb, (HID, 1), jnp.float32,
                               minval=-bound, maxval=bound),
        ]

    # fc4
    key, kw, kb = jax.random.split(key, 3)
    bound = 1.0 / jnp.sqrt(float(HID))
    params += [
        jax.random.uniform(kw, (OUT_DIM, HID), jnp.float32,
                           minval=-bound, maxval=bound),
        jax.random.uniform(kb, (OUT_DIM, 1), jnp.float32,
                           minval=-bound, maxval=bound),
    ]
    return tuple(params)


def critic_reference(state, action, params, matmul_dtype=jnp.float32):
    """Pure-JAX reference.  matmul_dtype=jnp.bfloat16 mimics the kernel's
    MXU-operand casting for fc2/fc3/fc4 (fc1 is f32 in both)."""
    w1s, w1a, b1, w2, b2, w3, b3, w4, b4 = params
    w1 = jnp.concatenate([w1s, w1a], axis=1)              # (64, 6)  [out, in]
    x = jnp.concatenate([state, action], axis=-1)         # (B, 6)

    def mm(a, w):
        return jnp.dot(a.astype(matmul_dtype), w.T.astype(matmul_dtype),
                       preferred_element_type=jnp.float32)

    h = jax.nn.softplus(x @ w1.T + b1[:, 0])
    h = jax.nn.softplus(mm(h, w2) + b2[:, 0])
    h = jax.nn.softplus(mm(h, w3) + b3[:, 0])
    return mm(h, w4) + b4[:, 0]                            # (B, 1)


if __name__ == "__main__":
    key = jax.random.PRNGKey(0)
    kp, ks, ka = jax.random.split(key, 3)

    params = init_params(kp)

    # Small batch that is NOT a multiple of the tile: exercises cdiv and the
    # partial tail block.  Second call forces a 2-step grid (tb=128).
    B = 200
    state = jax.random.normal(ks, (B, STATE_DIM), jnp.float32)
    action = jax.random.normal(ka, (B, ACTION_DIM), jnp.float32)

    q = jax.block_until_ready(critic_forward(state, action, params))
    q_tiled = jax.block_until_ready(
        critic_forward(state, action, params, max_tb=128))

    q_ref_f32 = critic_reference(state, action, params, jnp.float32)
    q_ref_bf16 = critic_reference(state, action, params, jnp.bfloat16)

    assert q.shape == (B, OUT_DIM)
    # Tiling must not change results (valid rows are independent of the tile).
    assert jnp.allclose(q_tiled, q, atol=1e-5, rtol=1e-5), "tiling mismatch"
    # Kernel vs bf16-matmul reference (same precision recipe) -- tight-ish.
    assert jnp.allclose(q, q_ref_bf16, atol=2e-2, rtol=2e-2), \
        "mismatch vs bf16 reference"
    # Kernel vs full-f32 reference -- loose tolerance for bf16 MXU operands.
    assert jnp.allclose(q, q_ref_f32, atol=5e-2, rtol=5e-2), \
        "mismatch vs f32 reference"

    print("KERNEL_OK")
</pallas_src>

<mosaic_0001>
module attributes {stable_mosaic.version = 11 : i64} {
  func.func @critic_kernel(%arg0: i32, %arg1: memref<5x256xf32, #tpu.memory_space<vmem>>, %arg2: memref<1x256xf32, #tpu.memory_space<vmem>>, %arg3: memref<64x5xf32, #tpu.memory_space<vmem>>, %arg4: memref<64x1xf32, #tpu.memory_space<vmem>>, %arg5: memref<64x1xf32, #tpu.memory_space<vmem>>, %arg6: memref<64x64xbf16, #tpu.memory_space<vmem>>, %arg7: memref<64x1xf32, #tpu.memory_space<vmem>>, %arg8: memref<64x64xbf16, #tpu.memory_space<vmem>>, %arg9: memref<64x1xf32, #tpu.memory_space<vmem>>, %arg10: memref<1x64xbf16, #tpu.memory_space<vmem>>, %arg11: memref<1x1xf32, #tpu.memory_space<vmem>>, %arg12: memref<1x256xf32, #tpu.memory_space<vmem>>) attributes {dimension_semantics = [#tpu.dimension_semantics<parallel>], iteration_bounds = array<i64: 1>, scalar_prefetch = 0 : i64, scratch_operands = 0 : i64, tpu.core_type = #tpu.core_type<tc>, window_params = [{transform_indices = @transform_0, window_bounds = array<i64: 5, 256>}, {transform_indices = @transform_1, window_bounds = array<i64: 1, 256>}, {pipeline_mode = #tpu.pipeline_mode<synchronous>, transform_indices = @transform_2, window_bounds = array<i64: 64, 5>}, {pipeline_mode = #tpu.pipeline_mode<synchronous>, transform_indices = @transform_3, window_bounds = array<i64: 64, 1>}, {pipeline_mode = #tpu.pipeline_mode<synchronous>, transform_indices = @transform_4, window_bounds = array<i64: 64, 1>}, {pipeline_mode = #tpu.pipeline_mode<synchronous>, transform_indices = @transform_5, window_bounds = array<i64: 64, 64>}, {pipeline_mode = #tpu.pipeline_mode<synchronous>, transform_indices = @transform_6, window_bounds = array<i64: 64, 1>}, {pipeline_mode = #tpu.pipeline_mode<synchronous>, transform_indices = @transform_7, window_bounds = array<i64: 64, 64>}, {pipeline_mode = #tpu.pipeline_mode<synchronous>, transform_indices = @transform_8, window_bounds = array<i64: 64, 1>}, {pipeline_mode = #tpu.pipeline_mode<synchronous>, transform_indices = @transform_9, window_bounds = array<i64: 1, 64>}, {pipeline_mode = #tpu.pipeline_mode<synchronous>, transform_indices = @transform_10, window_bounds = array<i64: 1, 1>}, {transform_indices = @transform_11, window_bounds = array<i64: 1, 256>}]} {
    %c0 = arith.constant 0 : index
    %c0_0 = arith.constant 0 : index
    %0 = vector.load %arg1[%c0, %c0_0] : memref<5x256xf32, #tpu.memory_space<vmem>>, vector<5x256xf32>
    %c0_1 = arith.constant 0 : index
    %c0_2 = arith.constant 0 : index
    %1 = vector.load %arg2[%c0_1, %c0_2] : memref<1x256xf32, #tpu.memory_space<vmem>>, vector<1x256xf32>
    %c0_3 = arith.constant 0 : index
    %c0_4 = arith.constant 0 : index
    %2 = vector.load %arg3[%c0_3, %c0_4] : memref<64x5xf32, #tpu.memory_space<vmem>>, vector<64x5xf32>
    %cst = arith.constant dense<0.000000e+00> : vector<64x256xf32>
    %3 = tpu.matmul %2, %0, %cst {dimension_numbers = #tpu.dot_dimension_numbers<[1], [0], [0], [1], [0, 0, 1, 1], [], []>} : vector<64x5xf32>, vector<5x256xf32>, vector<64x256xf32> -> vector<64x256xf32>
    %c0_5 = arith.constant 0 : index
    %c0_6 = arith.constant 0 : index
    %4 = vector.load %arg4[%c0_5, %c0_6] : memref<64x1xf32, #tpu.memory_space<vmem>>, vector<64x1xf32>
    %5 = vector.broadcast %4 : vector<64x1xf32> to vector<64x256xf32>
    %6 = vector.broadcast %1 : vector<1x256xf32> to vector<64x256xf32>
    %7 = arith.mulf %5, %6 : vector<64x256xf32>
    %8 = arith.addf %3, %7 : vector<64x256xf32>
    %c0_7 = arith.constant 0 : index
    %c0_8 = arith.constant 0 : index
    %9 = vector.load %arg5[%c0_7, %c0_8] : memref<64x1xf32, #tpu.memory_space<vmem>>, vector<64x1xf32>
    %10 = vector.broadcast %9 : vector<64x1xf32> to vector<64x256xf32>
    %11 = arith.addf %8, %10 : vector<64x256xf32>
    %cst_9 = arith.constant 2.000000e+01 : f32
    %12 = vector.broadcast %cst_9 : f32 to vector<64x256xf32>
    %13 = arith.minimumf %11, %12 : vector<64x256xf32>
    %cst_10 = arith.constant 2.000000e+01 : f32
    %14 = vector.broadcast %cst_10 : f32 to vector<64x256xf32>
    %15 = arith.cmpf ogt, %11, %14 : vector<64x256xf32>
    %16 = math.exp %13 : vector<64x256xf32>
    %17 = math.log1p %16 : vector<64x256xf32>
    %18 = arith.select %15, %11, %17 : vector<64x256xi1>, vector<64x256xf32>
    %c0_11 = arith.constant 0 : index
    %c0_12 = arith.constant 0 : index
    %19 = vector.load %arg6[%c0_11, %c0_12] : memref<64x64xbf16, #tpu.memory_space<vmem>>, vector<64x64xbf16>
    %20 = arith.truncf %18 : vector<64x256xf32> to vector<64x256xbf16>
    %cst_13 = arith.constant dense<0.000000e+00> : vector<64x256xf32>
    %21 = tpu.matmul %19, %20, %cst_13 {dimension_numbers = #tpu.dot_dimension_numbers<[1], [0], [0], [1], [0, 0, 1, 1], [], []>} : vector<64x64xbf16>, vector<64x256xbf16>, vector<64x256xf32> -> vector<64x256xf32>
    %c0_14 = arith.constant 0 : index
    %c0_15 = arith.constant 0 : index
    %22 = vector.load %arg7[%c0_14, %c0_15] : memref<64x1xf32, #tpu.memory_space<vmem>>, vector<64x1xf32>
    %23 = vector.broadcast %22 : vector<64x1xf32> to vector<64x256xf32>
    %24 = arith.addf %21, %23 : vector<64x256xf32>
    %cst_16 = arith.constant 2.000000e+01 : f32
    %25 = vector.broadcast %cst_16 : f32 to vector<64x256xf32>
    %26 = arith.minimumf %24, %25 : vector<64x256xf32>
    %cst_17 = arith.constant 2.000000e+01 : f32
    %27 = vector.broadcast %cst_17 : f32 to vector<64x256xf32>
    %28 = arith.cmpf ogt, %24, %27 : vector<64x256xf32>
    %29 = math.exp %26 : vector<64x256xf32>
    %30 = math.log1p %29 : vector<64x256xf32>
    %31 = arith.select %28, %24, %30 : vector<64x256xi1>, vector<64x256xf32>
    %c0_18 = arith.constant 0 : index
    %c0_19 = arith.constant 0 : index
    %32 = vector.load %arg8[%c0_18, %c0_19] : memref<64x64xbf16, #tpu.memory_space<vmem>>, vector<64x64xbf16>
    %33 = arith.truncf %31 : vector<64x256xf32> to vector<64x256xbf16>
    %cst_20 = arith.constant dense<0.000000e+00> : vector<64x256xf32>
    %34 = tpu.matmul %32, %33, %cst_20 {dimension_numbers = #tpu.dot_dimension_numbers<[1], [0], [0], [1], [0, 0, 1, 1], [], []>} : vector<64x64xbf16>, vector<64x256xbf16>, vector<64x256xf32> -> vector<64x256xf32>
    %c0_21 = arith.constant 0 : index
    %c0_22 = arith.constant 0 : index
    %35 = vector.load %arg9[%c0_21, %c0_22] : memref<64x1xf32, #tpu.memory_space<vmem>>, vector<64x1xf32>
    %36 = vector.broadcast %35 : vector<64x1xf32> to vector<64x256xf32>
    %37 = arith.addf %34, %36 : vector<64x256xf32>
    %cst_23 = arith.constant 2.000000e+01 : f32
    %38 = vector.broadcast %cst_23 : f32 to vector<64x256xf32>
    %39 = arith.minimumf %37, %38 : vector<64x256xf32>
    %cst_24 = arith.constant 2.000000e+01 : f32
    %40 = vector.broadcast %cst_24 : f32 to vector<64x256xf32>
    %41 = arith.cmpf ogt, %37, %40 : vector<64x256xf32>
    %42 = math.exp %39 : vector<64x256xf32>
    %43 = math.log1p %42 : vector<64x256xf32>
    %44 = arith.select %41, %37, %43 : vector<64x256xi1>, vector<64x256xf32>
    %c0_25 = arith.constant 0 : index
    %c0_26 = arith.constant 0 : index
    %45 = vector.load %arg10[%c0_25, %c0_26] : memref<1x64xbf16, #tpu.memory_space<vmem>>, vector<1x64xbf16>
    %46 = arith.truncf %44 : vector<64x256xf32> to vector<64x256xbf16>
    %cst_27 = arith.constant dense<0.000000e+00> : vector<1x256xf32>
    %47 = tpu.matmul %45, %46, %cst_27 {dimension_numbers = #tpu.dot_dimension_numbers<[1], [0], [0], [1], [0, 0, 1, 1], [], []>} : vector<1x64xbf16>, vector<64x256xbf16>, vector<1x256xf32> -> vector<1x256xf32>
    %c0_28 = arith.constant 0 : index
    %c0_29 = arith.constant 0 : index
    %48 = vector.load %arg11[%c0_28, %c0_29] : memref<1x1xf32, #tpu.memory_space<vmem>>, vector<1x1xf32>
    %49 = vector.broadcast %48 : vector<1x1xf32> to vector<1x256xf32>
    %50 = arith.addf %47, %49 : vector<1x256xf32>
    %c0_30 = arith.constant 0 : index
    %c0_31 = arith.constant 0 : index
    %51 = vector.load %arg12[%c0_30, %c0_31] : memref<1x256xf32, #tpu.memory_space<vmem>>, vector<1x256xf32>
    tpu.vector_store %arg12[%c0_30, %c0_31], %50 {strides = array<i32>} : memref<1x256xf32, #tpu.memory_space<vmem>>, vector<1x256xf32>,
    return
  }
  func.func @transform_0(%arg0: i32) -> (i32, i32) {
    %c0_i32 = arith.constant 0 : i32
    %c0_i32_0 = arith.constant 0 : i32
    return %c0_i32, %arg0 : i32, i32
  }
  func.func @transform_1(%arg0: i32) -> (i32, i32) {
    %c0_i32 = arith.constant 0 : i32
    %c0_i32_0 = arith.constant 0 : i32
    return %c0_i32, %arg0 : i32, i32
  }
  func.func @transform_2(%arg0: i32) -> (i32, i32) {
    %c0_i32 = arith.constant 0 : i32
    %c0_i32_0 = arith.constant 0 : i32
    %c0_i32_1 = arith.constant 0 : i32
    return %c0_i32, %c0_i32_0 : i32, i32
  }
  func.func @transform_3(%arg0: i32) -> (i32, i32) {
    %c0_i32 = arith.constant 0 : i32
    %c0_i32_0 = arith.constant 0 : i32
    %c0_i32_1 = arith.constant 0 : i32
    return %c0_i32, %c0_i32_0 : i32, i32
  }
  func.func @transform_4(%arg0: i32) -> (i32, i32) {
    %c0_i32 = arith.constant 0 : i32
    %c0_i32_0 = arith.constant 0 : i32
    %c0_i32_1 = arith.constant 0 : i32
    return %c0_i32, %c0_i32_0 : i32, i32
  }
  func.func @transform_5(%arg0: i32) -> (i32, i32) {
    %c0_i32 = arith.constant 0 : i32
    %c0_i32_0 = arith.constant 0 : i32
    %c0_i32_1 = arith.constant 0 : i32
    return %c0_i32, %c0_i32_0 : i32, i32
  }
  func.func @transform_6(%arg0: i32) -> (i32, i32) {
    %c0_i32 = arith.constant 0 : i32
    %c0_i32_0 = arith.constant 0 : i32
    %c0_i32_1 = arith.constant 0 : i32
    return %c0_i32, %c0_i32_0 : i32, i32
  }
  func.func @transform_7(%arg0: i32) -> (i32, i32) {
    %c0_i32 = arith.constant 0 : i32
    %c0_i32_0 = arith.constant 0 : i32
    %c0_i32_1 = arith.constant 0 : i32
    return %c0_i32, %c0_i32_0 : i32, i32
  }
  func.func @transform_8(%arg0: i32) -> (i32, i32) {
    %c0_i32 = arith.constant 0 : i32
    %c0_i32_0 = arith.constant 0 : i32
    %c0_i32_1 = arith.constant 0 : i32
    return %c0_i32, %c0_i32_0 : i32, i32
  }
  func.func @transform_9(%arg0: i32) -> (i32, i32) {
    %c0_i32 = arith.constant 0 : i32
    %c0_i32_0 = arith.constant 0 : i32
    %c0_i32_1 = arith.constant 0 : i32
    return %c0_i32, %c0_i32_0 : i32, i32
  }
  func.func @transform_10(%arg0: i32) -> (i32, i32) {
    %c0_i32 = arith.constant 0 : i32
    %c0_i32_0 = arith.constant 0 : i32
    %c0_i32_1 = arith.constant 0 : i32
    return %c0_i32, %c0_i32_0 : i32, i32
  }
  func.func @transform_11(%arg0: i32) -> (i32, i32) {
    %c0_i32 = arith.constant 0 : i32
    %c0_i32_0 = arith.constant 0 : i32
    return %c0_i32, %arg0 : i32, i32
  }
}

</mosaic_0001>

<llo_original>
// kernel: tpu_custom_call.1
$region0: #{tpu_custom_call.1}
  #allocation0 [shape = 'u32[]', space=smem, size = 0x4, offset = 0x4, fixed_abs, tag = 'smem constant byte address 0x4 - core index']
  #allocation1 [shape = 'u32[144,128]{1,0:T(1,128)}', space=vmem, size = 0x12000, scoped, tag = 'internal scratch']
  #allocation2 [shape = 'f32[1,1]{1,0:T(1,128)S(1)}', space=vmem, size = 0x200, scoped, tag = 'scoped memory for tpu_custom_call.1']
  %s0 = inlined_call_operand.vmem [shape: f32[5,200], index: 0, kind: input, shape index: {}]
  %s1 = inlined_call_operand.vmem [shape: f32[1,200], index: 1, kind: input, shape index: {}]
  %s2 = inlined_call_operand.vmem [shape: f32[64,5], index: 2, kind: input, shape index: {}]
  %s3 = inlined_call_operand.vmem [shape: f32[64,1], index: 3, kind: input, shape index: {}]
  %s4 = inlined_call_operand.vmem [shape: f32[64,1], index: 4, kind: input, shape index: {}]
  %s5 = inlined_call_operand.vmem [shape: bf16[64,64], index: 5, kind: input, shape index: {}]
  %s6 = inlined_call_operand.vmem [shape: f32[64,1], index: 6, kind: input, shape index: {}]
  %s7 = inlined_call_operand.vmem [shape: bf16[64,64], index: 7, kind: input, shape index: {}]
  %s8 = inlined_call_operand.vmem [shape: f32[64,1], index: 8, kind: input, shape index: {}]
  %s9 = inlined_call_operand.vmem [shape: bf16[1,64], index: 9, kind: input, shape index: {}]
  %s10 = inlined_call_operand.<no memory space> [shape: f32[1,1], index: 10, kind: input, shape index: {}]
  %s11 = inlined_call_operand.hbm [shape: f32[1,256], index: 11, kind: output, shape index: {}]
  %s12 = sld [smem:[#allocation0]]
  $region54: #{tpu_custom_call.1} parent=0
    _
  %s14 = ssub.s32 1, %s12
  %s15 = scalar_select 0, %s14, %s12
  %v16 = vstv %s10
  %17 = vst [vmem:[#allocation2] sm:$0x1] %v16
  $region1: #{tpu_custom_call.1} parent=0
    #allocation3 [shape = 'u8[1024]{0}', space=vmem, size = 0x400, scoped, tag = 'output window, operand 0, single buffered']
    #allocation4 [shape = 's32[1]{0}', space=sflag, size = 0x4, scoped, tag = 'scoped memory for tpu_custom_call.1']
    %18 = vsyncpa [#allocation4], 0
    // Predicated region
    $region2: #{tpu_custom_call.1} parent=1 // pred_check
      _
    $region3: #{tpu_custom_call.1} parent=1 // pred_check_branch
      %20 = sbr.rel (0) target = $region5
    $region4: #{tpu_custom_call.1} parent=1 // pred_region
      _
    $region5: #{tpu_custom_call.1} parent=1 // pred_fallthru
      _
    // Predicated region
    $region6: #{tpu_custom_call.1} parent=1 // pred_check
      _
    $region7: #{tpu_custom_call.1} parent=1 // pred_check_branch
      %22 = sbr.rel (0) target = $region9
    $region8: #{tpu_custom_call.1} parent=1 // pred_region
      _
    $region9: #{tpu_custom_call.1} parent=1 // pred_fallthru
      _
    // Predicated region
    $region10: #{tpu_custom_call.1} parent=1 // pred_check
      _
    $region11: #{tpu_custom_call.1} parent=1 // pred_check_branch
      %24 = sbr.rel (0) target = $region13
    $region12: #{tpu_custom_call.1} parent=1 // pred_region
      _
    $region13: #{tpu_custom_call.1} parent=1 // pred_fallthru
      _
    // Predicated region
    $region14: #{tpu_custom_call.1} parent=1 // pred_check
      _
    $region15: #{tpu_custom_call.1} parent=1 // pred_check_branch
      %26 = sbr.rel (0) target = $region17
    $region16: #{tpu_custom_call.1} parent=1 // pred_region
      _
    $region17: #{tpu_custom_call.1} parent=1 // pred_fallthru
      _
    // Predicated region
    $region18: #{tpu_custom_call.1} parent=1 // pred_check
      _
    $region19: #{tpu_custom_call.1} parent=1 // pred_check_branch
      %28 = sbr.rel (0) target = $region21
    $region20: #{tpu_custom_call.1} parent=1 // pred_region
      _
    $region21: #{tpu_custom_call.1} parent=1 // pred_fallthru
      _
    // Predicated region
    $region22: #{tpu_custom_call.1} parent=1 // pred_check
      _
    $region23: #{tpu_custom_call.1} parent=1 // pred_check_branch
      %30 = sbr.rel (0) target = $region25
    $region24: #{tpu_custom_call.1} parent=1 // pred_region
      _
    $region25: #{tpu_custom_call.1} parent=1 // pred_fallthru
      _
    // Predicated region
    $region26: #{tpu_custom_call.1} parent=1 // pred_check
      _
    $region27: #{tpu_custom_call.1} parent=1 // pred_check_branch
      %32 = sbr.rel (0) target = $region29
    $region28: #{tpu_custom_call.1} parent=1 // pred_region
      _
    $region29: #{tpu_custom_call.1} parent=1 // pred_fallthru
      _
    // Predicated region
    $region30: #{tpu_custom_call.1} parent=1 // pred_check
      _
    $region31: #{tpu_custom_call.1} parent=1 // pred_check_branch
      %34 = sbr.rel (0) target = $region33
    $region32: #{tpu_custom_call.1} parent=1 // pred_region
      _
    $region33: #{tpu_custom_call.1} parent=1 // pred_fallthru
      _
    // Predicated region
    $region34: #{tpu_custom_call.1} parent=1 // pred_check
      _
    $region35: #{tpu_custom_call.1} parent=1 // pred_check_branch
      %36 = sbr.rel (0) target = $region37
    $region36: #{tpu_custom_call.1} parent=1 // pred_region
      _
    $region37: #{tpu_custom_call.1} parent=1 // pred_fallthru
      _
    // Predicated region
    $region38: #{tpu_custom_call.1} parent=1 // pred_check
      _
    $region39: #{tpu_custom_call.1} parent=1 // pred_check_branch
      %38 = sbr.rel (0) target = $region41
    $region40: #{tpu_custom_call.1} parent=1 // pred_region
      _
    $region41: #{tpu_custom_call.1} parent=1 // pred_fallthru
      _
    // Predicated region
    $region42: #{tpu_custom_call.1} parent=1 // pred_check
      _
    $region43: #{tpu_custom_call.1} parent=1 // pred_check_branch
      %40 = sbr.rel (0) target = $region45
    $region44: #{tpu_custom_call.1} parent=1 // pred_region
      _
    $region45: #{tpu_custom_call.1} parent=1 // pred_fallthru
      _
    %v42 = vld [vmem:[%s0] sm:$0x1f]
    %v43 = vld [vmem:[%s0 + $0x8] sm:$0x1f]
    %v44 = vld [vmem:[%s1] sm:$0x3]
    %v45 = vld [vmem:[%s2] sm:$0xff]
    %v46 = vld [vmem:[%s2 + $0x8] sm:$0xff]
    %v47 = vld [vmem:[%s2 + $0x10] sm:$0xff]
    %v48 = vld [vmem:[%s2 + $0x18] sm:$0xff]
    %v49 = vld [vmem:[%s2 + $0x20] sm:$0xff]
    %v50 = vld [vmem:[%s2 + $0x28] sm:$0xff]
    %v51 = vld [vmem:[%s2 + $0x30] sm:$0xff]
    %v52 = vld [vmem:[%s2 + $0x38] sm:$0xff]
    %v53 = vld [vmem:[%s3] sm:$0xff]
    %v54 = vld [vmem:[%s3 + $0x8] sm:$0xff]
    %v55 = vld [vmem:[%s3 + $0x10] sm:$0xff]
    %v56 = vld [vmem:[%s3 + $0x18] sm:$0xff]
    %v57 = vld [vmem:[%s3 + $0x20] sm:$0xff]
    %v58 = vld [vmem:[%s3 + $0x28] sm:$0xff]
    %v59 = vld [vmem:[%s3 + $0x30] sm:$0xff]
    %v60 = vld [vmem:[%s3 + $0x38] sm:$0xff]
    %62 = vset.pattern.permute.xlu0 0
    %63 = vperm.xlu0 %62, %v53
    %v64 = vpop.permute.xlu0 %63
    %67 = vset.pattern.permute.xlu0 0
    %68 = vperm.xlu0 %67, %v54
    %v69 = vpop.permute.xlu0 %68
    %72 = vset.pattern.permute.xlu0 0
    %73 = vperm.xlu0 %72, %v55
    %v74 = vpop.permute.xlu0 %73
    %77 = vset.pattern.permute.xlu0 0
    %78 = vperm.xlu0 %77, %v56
    %v79 = vpop.permute.xlu0 %78
    %82 = vset.pattern.permute.xlu0 0
    %83 = vperm.xlu0 %82, %v57
    %v84 = vpop.permute.xlu0 %83
    %87 = vset.pattern.permute.xlu0 0
    %88 = vperm.xlu0 %87, %v58
    %v89 = vpop.permute.xlu0 %88
    %92 = vset.pattern.permute.xlu0 0
    %93 = vperm.xlu0 %92, %v59
    %v94 = vpop.permute.xlu0 %93
    %97 = vset.pattern.permute.xlu0 0
    %98 = vperm.xlu0 %97, %v60
    %v99 = vpop.permute.xlu0 %98
    %v102 = vlaneseq
    %v103 = vshrl.u32 %v102, 7
    %v104 = vsub.s32 0, %v103
    %v105 = vrot.slane %v44, %v104
    %v106 = vlaneseq
    %v107 = vshrl.u32 %v106, 7
    %v108 = vsub.s32 1, %v107
    %v109 = vrot.slane %v44, %v108
    %v112 = vmul.f32 %v64, %v105
    %v113 = vmul.f32 %v64, %v109
    %v114 = vmul.f32 %v69, %v105
    %v115 = vmul.f32 %v69, %v109
    %v116 = vmul.f32 %v74, %v105
    %v117 = vmul.f32 %v74, %v109
    %v118 = vmul.f32 %v79, %v105
    %v119 = vmul.f32 %v79, %v109
    %v120 = vmul.f32 %v84, %v105
    %v121 = vmul.f32 %v84, %v109
    %v122 = vmul.f32 %v89, %v105
    %v123 = vmul.f32 %v89, %v109
    %v124 = vmul.f32 %v94, %v105
    %v125 = vmul.f32 %v94, %v109
    %v126 = vmul.f32 %v99, %v105
    %v127 = vmul.f32 %v99, %v109
    %vm128 = vcmask 39936
    %v130 = vsel %vm128, %v45, 0
    %v133 = vsel %vm128, %v46, 0
    %v136 = vsel %vm128, %v47, 0
    %v139 = vsel %vm128, %v48, 0
    %v142 = vsel %vm128, %v49, 0
    %v145 = vsel %vm128, %v50, 0
    %v148 = vsel %vm128, %v51, 0
    %v151 = vsel %vm128, %v52, 0
    %vm153 = vcmask 1044480
    %v155 = vsel %vm153, %v42, 0
    %v158 = vsel %vm153, %v43, 0
    %160 = vmatprep.subr.mxu0 %v158
    %161 = vmatpush1.msra.mxu0 %v155
    %162 = vmatprep.subr.mxu0 0.0
    %163 = vmatpush1.msra.mxu0 0.0
    %164 = vmatprep.subr.mxu0 0.0
    %165 = vmatpush1.msra.mxu0 0.0
    %166 = vmatprep.subr.mxu0 0.0
    %167 = vmatpush1.msra.mxu0 0.0
    %168 = vmatprep.subr.mxu0 0.0
    %169 = vmatpush1.msra.mxu0 0.0
    %170 = vmatprep.subr.mxu0 0.0
    %171 = vmatpush1.msra.mxu0 0.0
    %172 = vmatprep.subr.mxu0 0.0
    %173 = vmatpush1.msra.mxu0 0.0
    %174 = vmatprep.subr.mxu0 0.0
    %175 = vmatpush1.msra.mxu0 0.0
    %176 = vmatprep.subr.mxu0 0.0
    %177 = vmatpush1.msra.mxu0 0.0
    %178 = vmatprep.subr.mxu0 0.0
    %179 = vmatpush1.msra.mxu0 0.0
    %180 = vmatprep.subr.mxu0 0.0
    %181 = vmatpush1.msra.mxu0 0.0
    %182 = vmatprep.subr.mxu0 0.0
    %183 = vmatpush1.msra.mxu0 0.0
    %184 = vmatprep.subr.mxu0 0.0
    %185 = vmatpush1.msra.mxu0 0.0
    %186 = vmatprep.subr.mxu0 0.0
    %187 = vmatpush1.msra.mxu0 0.0
    %188 = vmatprep.subr.mxu0 0.0
    %189 = vmatpush1.msra.mxu0 0.0
    %190 = vmatprep.subr.mxu0 0.0
    %191 = vmatpush1.msra.mxu0 0.0
    %192 = vmatprep.subr.mxu0 0.0
    %193 = vmatpush1.msra.mxu0 0.0
    %194 = vmatprep.subr.mxu0 0.0
    %195 = vmatpush1.msra.mxu0 0.0
    %196 = vmatprep.subr.mxu0 0.0
    %197 = vmatpush1.msra.mxu0 0.0
    %198 = vmatprep.subr.mxu0 0.0
    %199 = vmatpush1.msra.mxu0 0.0
    %200 = vmatprep.subr.mxu0 0.0
    %201 = vmatpush1.msra.mxu0 0.0
    %202 = vmatprep.subr.mxu0 0.0
    %203 = vmatpush1.msra.mxu0 0.0
    %204 = vmatprep.subr.mxu0 0.0
    %205 = vmatpush1.msra.mxu0 0.0
    %206 = vmatprep.subr.mxu0 0.0
    %207 = vmatpush1.msra.mxu0 0.0
    %208 = vmatprep.subr.mxu0 0.0
    %209 = vmatpush1.msra.mxu0 0.0
    %210 = vmatprep.subr.mxu0 0.0
    %211 = vmatpush1.msra.mxu0 0.0
    %212 = vmatprep.subr.mxu0 0.0
    %213 = vmatpush1.msra.mxu0 0.0
    %214 = vmatprep.subr.mxu0 0.0
    %215 = vmatpush1.msra.mxu0 0.0
    %216 = vmatprep.subr.mxu0 0.0
    %217 = vmatpush1.msra.mxu0 0.0
    %218 = vmatprep.subr.mxu0 0.0
    %219 = vmatpush1.msra.mxu0 0.0
    %220 = vmatprep.subr.mxu0 0.0
    %221 = vmatpush1.msra.mxu0 0.0
    %222 = vmatprep.subr.mxu0 0.0
    %223 = vmatpush1.msra.mxu0 0.0
    %224 = vmatprep.mubr.f32.mxu0 0.0
    %225 = vmatmul.mubr.f32.gmra.mrb[0].mxu0 %v130
    %v226 = vpop.f32.mrb[0].mxu0
    %v227 = vadd.f32 %v112, %v226
    %v228 = vpop.f32.mrb[0].mxu0
    %v229 = vadd.f32 %v113, %v228
    %230 = vmatprep.mubr.f32.mxu0 0.0
    %231 = vmatmul.mubr.f32.gmra.mrb[0].mxu0 %v133
    %v232 = vpop.f32.mrb[0].mxu0
    %v233 = vadd.f32 %v114, %v232
    %v234 = vpop.f32.mrb[0].mxu0
    %v235 = vadd.f32 %v115, %v234
    %236 = vmatprep.mubr.f32.mxu0 0.0
    %237 = vmatmul.mubr.f32.gmra.mrb[0].mxu0 %v136
    %v238 = vpop.f32.mrb[0].mxu0
    %v239 = vadd.f32 %v116, %v238
    %v240 = vpop.f32.mrb[0].mxu0
    %v241 = vadd.f32 %v117, %v240
    %242 = vmatprep.mubr.f32.mxu0 0.0
    %243 = vmatmul.mubr.f32.gmra.mrb[0].mxu0 %v139
    %v244 = vpop.f32.mrb[0].mxu0
    %v245 = vadd.f32 %v118, %v244
    %v246 = vpop.f32.mrb[0].mxu0
    %v247 = vadd.f32 %v119, %v246
    %248 = vmatprep.mubr.f32.mxu0 0.0
    %249 = vmatmul.mubr.f32.gmra.mrb[0].mxu0 %v142
    %v250 = vpop.f32.mrb[0].mxu0
    %v251 = vadd.f32 %v120, %v250
    %v252 = vpop.f32.mrb[0].mxu0
    %v253 = vadd.f32 %v121, %v252
    %254 = vmatprep.mubr.f32.mxu0 0.0
    %255 = vmatmul.mubr.f32.gmra.mrb[0].mxu0 %v145
    %v256 = vpop.f32.mrb[0].mxu0
    %v257 = vadd.f32 %v122, %v256
    %v258 = vpop.f32.mrb[0].mxu0
    %v259 = vadd.f32 %v123, %v258
    %260 = vmatprep.mubr.f32.mxu0 0.0
    %261 = vmatmul.mubr.f32.gmra.mrb[0].mxu0 %v148
    %v262 = vpop.f32.mrb[0].mxu0
    %v263 = vadd.f32 %v124, %v262
    %v264 = vpop.f32.mrb[0].mxu0
    %v265 = vadd.f32 %v125, %v264
    %266 = vmatprep.mubr.f32.mxu0 0.0
    %267 = vmatmul.mubr.f32.gmra.mrb[0].mxu0 %v151
    %v268 = vpop.f32.mrb[0].mxu0
    %v269 = vadd.f32 %v126, %v268
    %v270 = vpop.f32.mrb[0].mxu0
    %v271 = vadd.f32 %v127, %v270
    %272 = vdwg.mxu0
    %v273 = vld [vmem:[%s4] sm:$0xff]
    %v274 = vld [vmem:[%s4 + $0x8] sm:$0xff]
    %v275 = vld [vmem:[%s4 + $0x10] sm:$0xff]
    %v276 = vld [vmem:[%s4 + $0x18] sm:$0xff]
    %v277 = vld [vmem:[%s4 + $0x20] sm:$0xff]
    %v278 = vld [vmem:[%s4 + $0x28] sm:$0xff]
    %v279 = vld [vmem:[%s4 + $0x30] sm:$0xff]
    %v280 = vld [vmem:[%s4 + $0x38] sm:$0xff]
    %282 = vset.pattern.permute.xlu0 0
    %283 = vperm.xlu0 %282, %v273
    %v284 = vpop.permute.xlu0 %283
    %287 = vset.pattern.permute.xlu0 0
    %288 = vperm.xlu0 %287, %v274
    %v289 = vpop.permute.xlu0 %288
    %292 = vset.pattern.permute.xlu0 0
    %293 = vperm.xlu0 %292, %v275
    %v294 = vpop.permute.xlu0 %293
    %297 = vset.pattern.permute.xlu0 0
    %298 = vperm.xlu0 %297, %v276
    %v299 = vpop.permute.xlu0 %298
    %302 = vset.pattern.permute.xlu0 0
    %303 = vperm.xlu0 %302, %v277
    %v304 = vpop.permute.xlu0 %303
    %307 = vset.pattern.permute.xlu0 0
    %308 = vperm.xlu0 %307, %v278
    %v309 = vpop.permute.xlu0 %308
    %312 = vset.pattern.permute.xlu0 0
    %313 = vperm.xlu0 %312, %v279
    %v314 = vpop.permute.xlu0 %313
    %317 = vset.pattern.permute.xlu0 0
    %318 = vperm.xlu0 %317, %v280
    %v319 = vpop.permute.xlu0 %318
    %v321 = vadd.f32 %v227, %v284
    %v322 = vadd.f32 %v229, %v284
    %v323 = vadd.f32 %v233, %v289
    %v324 = vadd.f32 %v235, %v289
    %v325 = vadd.f32 %v239, %v294
    %v326 = vadd.f32 %v241, %v294
    %v327 = vadd.f32 %v245, %v299
    %v328 = vadd.f32 %v247, %v299
    %v329 = vadd.f32 %v251, %v304
    %v330 = vadd.f32 %v253, %v304
    %v331 = vadd.f32 %v257, %v309
    %v332 = vadd.f32 %v259, %v309
    %v333 = vadd.f32 %v263, %v314
    %v334 = vadd.f32 %v265, %v314
    %v335 = vadd.f32 %v269, %v319
    %v336 = vadd.f32 %v271, %v319
    %v337 = vmin.f32 %v321, 20.0
    %v338 = vmin.f32 %v322, 20.0
    %v339 = vmin.f32 %v323, 20.0
    %v340 = vmin.f32 %v324, 20.0
    %v341 = vmin.f32 %v325, 20.0
    %v342 = vmin.f32 %v326, 20.0
    %v343 = vmin.f32 %v327, 20.0
    %v344 = vmin.f32 %v328, 20.0
    %v345 = vmin.f32 %v329, 20.0
    %v346 = vmin.f32 %v330, 20.0
    %v347 = vmin.f32 %v331, 20.0
    %v348 = vmin.f32 %v332, 20.0
    %v349 = vmin.f32 %v333, 20.0
    %v350 = vmin.f32 %v334, 20.0
    %v351 = vmin.f32 %v335, 20.0
    %v352 = vmin.f32 %v336, 20.0
    %vm353 = vcmp.gt.f32.partialorder %v321, 20.0
    %vm354 = vcmp.gt.f32.partialorder %v322, 20.0
    %vm355 = vcmp.gt.f32.partialorder %v323, 20.0
    %vm356 = vcmp.gt.f32.partialorder %v324, 20.0
    %vm357 = vcmp.gt.f32.partialorder %v325, 20.0
    %vm358 = vcmp.gt.f32.partialorder %v326, 20.0
    %vm359 = vcmp.gt.f32.partialorder %v327, 20.0
    %vm360 = vcmp.gt.f32.partialorder %v328, 20.0
    %vm361 = vcmp.gt.f32.partialorder %v329, 20.0
    %vm362 = vcmp.gt.f32.partialorder %v330, 20.0
    %vm363 = vcmp.gt.f32.partialorder %v331, 20.0
    %vm364 = vcmp.gt.f32.partialorder %v332, 20.0
    %vm365 = vcmp.gt.f32.partialorder %v333, 20.0
    %vm366 = vcmp.gt.f32.partialorder %v334, 20.0
    %vm367 = vcmp.gt.f32.partialorder %v335, 20.0
    %vm368 = vcmp.gt.f32.partialorder %v336, 20.0
    %v369 = vmul.f32 %v337, 1.442695
    %v370 = vpow.pop %v369
    %v371 = vmul.f32 %v338, 1.442695
    %v372 = vpow.pop %v371
    %v373 = vmul.f32 %v339, 1.442695
    %v374 = vpow.pop %v373
    %v375 = vmul.f32 %v340, 1.442695
    %v376 = vpow.pop %v375
    %v377 = vmul.f32 %v341, 1.442695
    %v378 = vpow.pop %v377
    %v379 = vmul.f32 %v342, 1.442695
    %v380 = vpow.pop %v379
    %v381 = vmul.f32 %v343, 1.442695
    %v382 = vpow.pop %v381
    %v383 = vmul.f32 %v344, 1.442695
    %v384 = vpow.pop %v383
    %v385 = vmul.f32 %v345, 1.442695
    %v386 = vpow.pop %v385
    %v387 = vmul.f32 %v346, 1.442695
    %v388 = vpow.pop %v387
    %v389 = vmul.f32 %v347, 1.442695
    %v390 = vpow.pop %v389
    %v391 = vmul.f32 %v348, 1.442695
    %v392 = vpow.pop %v391
    %v393 = vmul.f32 %v349, 1.442695
    %v394 = vpow.pop %v393
    %v395 = vmul.f32 %v350, 1.442695
    %v396 = vpow.pop %v395
    %v397 = vmul.f32 %v351, 1.442695
    %v398 = vpow.pop %v397
    %v399 = vmul.f32 %v352, 1.442695
    %v400 = vpow.pop %v399
    %v401 = vadd.f32 %v370, 1.0
    %v402 = vlog2.pop %v401
    %v403 = vmul.f32 %v402, 0.6931472
    %v404 = vmul.f32 -0.5, %v370
    %v405 = vadd.f32 %v404, 1.0
    %v406 = vmul.f32 %v405, %v370
    %v407 = vand.u32 2147483647, %v370
    %vm408 = vcmp.lt.f32.partialorder %v407, 0.0004427343
    %v409 = vsel %vm408, %v406, %v403
    %v410 = vadd.f32 %v372, 1.0
    %v411 = vlog2.pop %v410
    %v412 = vmul.f32 %v411, 0.6931472
    %v413 = vmul.f32 -0.5, %v372
    %v414 = vadd.f32 %v413, 1.0
    %v415 = vmul.f32 %v414, %v372
    %v416 = vand.u32 2147483647, %v372
    %vm417 = vcmp.lt.f32.partialorder %v416, 0.0004427343
    %v418 = vsel %vm417, %v415, %v412
    %v419 = vadd.f32 %v374, 1.0
    %v420 = vlog2.pop %v419
    %v421 = vmul.f32 %v420, 0.6931472
    %v422 = vmul.f32 -0.5, %v374
    %v423 = vadd.f32 %v422, 1.0
    %v424 = vmul.f32 %v423, %v374
    %v425 = vand.u32 2147483647, %v374
    %vm426 = vcmp.lt.f32.partialorder %v425, 0.0004427343
    %v427 = vsel %vm426, %v424, %v421
    %v428 = vadd.f32 %v376, 1.0
    %v429 = vlog2.pop %v428
    %v430 = vmul.f32 %v429, 0.6931472
    %v431 = vmul.f32 -0.5, %v376
    %v432 = vadd.f32 %v431, 1.0
    %v433 = vmul.f32 %v432, %v376
    %v434 = vand.u32 2147483647, %v376
    %vm435 = vcmp.lt.f32.partialorder %v434, 0.0004427343
    %v436 = vsel %vm435, %v433, %v430
    %v437 = vadd.f32 %v378, 1.0
    %v438 = vlog2.pop %v437
    %v439 = vmul.f32 %v438, 0.6931472
    %v440 = vmul.f32 -0.5, %v378
    %v441 = vadd.f32 %v440, 1.0
    %v442 = vmul.f32 %v441, %v378
    %v443 = vand.u32 2147483647, %v378
    %vm444 = vcmp.lt.f32.partialorder %v443, 0.0004427343
    %v445 = vsel %vm444, %v442, %v439
    %v446 = vadd.f32 %v380, 1.0
    %v447 = vlog2.pop %v446
    %v448 = vmul.f32 %v447, 0.6931472
    %v449 = vmul.f32 -0.5, %v380
    %v450 = vadd.f32 %v449, 1.0
    %v451 = vmul.f32 %v450, %v380
    %v452 = vand.u32 2147483647, %v380
    %vm453 = vcmp.lt.f32.partialorder %v452, 0.0004427343
    %v454 = vsel %vm453, %v451, %v448
    %v455 = vadd.f32 %v382, 1.0
    %v456 = vlog2.pop %v455
    %v457 = vmul.f32 %v456, 0.6931472
    %v458 = vmul.f32 -0.5, %v382
    %v459 = vadd.f32 %v458, 1.0
    %v460 = vmul.f32 %v459, %v382
    %v461 = vand.u32 2147483647, %v382
    %vm462 = vcmp.lt.f32.partialorder %v461, 0.0004427343
    %v463 = vsel %vm462, %v460, %v457
    %v464 = vadd.f32 %v384, 1.0
    %v465 = vlog2.pop %v464
    %v466 = vmul.f32 %v465, 0.6931472
    %v467 = vmul.f32 -0.5, %v384
    %v468 = vadd.f32 %v467, 1.0
    %v469 = vmul.f32 %v468, %v384
    %v470 = vand.u32 2147483647, %v384
    %vm471 = vcmp.lt.f32.partialorder %v470, 0.0004427343
    %v472 = vsel %vm471, %v469, %v466
    %v473 = vadd.f32 %v386, 1.0
    %v474 = vlog2.pop %v473
    %v475 = vmul.f32 %v474, 0.6931472
    %v476 = vmul.f32 -0.5, %v386
    %v477 = vadd.f32 %v476, 1.0
    %v478 = vmul.f32 %v477, %v386
    %v479 = vand.u32 2147483647, %v386
    %vm480 = vcmp.lt.f32.partialorder %v479, 0.0004427343
    %v481 = vsel %vm480, %v478, %v475
    %v482 = vadd.f32 %v388, 1.0
    %v483 = vlog2.pop %v482
    %v484 = vmul.f32 %v483, 0.6931472
    %v485 = vmul.f32 -0.5, %v388
    %v486 = vadd.f32 %v485, 1.0
    %v487 = vmul.f32 %v486, %v388
    %v488 = vand.u32 2147483647, %v388
    %vm489 = vcmp.lt.f32.partialorder %v488, 0.0004427343
    %v490 = vsel %vm489, %v487, %v484
    %v491 = vadd.f32 %v390, 1.0
    %v492 = vlog2.pop %v491
    %v493 = vmul.f32 %v492, 0.6931472
    %v494 = vmul.f32 -0.5, %v390
    %v495 = vadd.f32 %v494, 1.0
    %v496 = vmul.f32 %v495, %v390
    %v497 = vand.u32 2147483647, %v390
    %vm498 = vcmp.lt.f32.partialorder %v497, 0.0004427343
    %v499 = vsel %vm498, %v496, %v493
    %v500 = vadd.f32 %v392, 1.0
    %v501 = vlog2.pop %v500
    %v502 = vmul.f32 %v501, 0.6931472
    %v503 = vmul.f32 -0.5, %v392
    %v504 = vadd.f32 %v503, 1.0
    %v505 = vmul.f32 %v504, %v392
    %v506 = vand.u32 2147483647, %v392
    %vm507 = vcmp.lt.f32.partialorder %v506, 0.0004427343
    %v508 = vsel %vm507, %v505, %v502
    %v509 = vadd.f32 %v394, 1.0
    %v510 = vlog2.pop %v509
    %v511 = vmul.f32 %v510, 0.6931472
    %v512 = vmul.f32 -0.5, %v394
    %v513 = vadd.f32 %v512, 1.0
    %v514 = vmul.f32 %v513, %v394
    %v515 = vand.u32 2147483647, %v394
    %vm516 = vcmp.lt.f32.partialorder %v515, 0.0004427343
    %v517 = vsel %vm516, %v514, %v511
    %v518 = vadd.f32 %v396, 1.0
    %v519 = vlog2.pop %v518
    %v520 = vmul.f32 %v519, 0.6931472
    %v521 = vmul.f32 -0.5, %v396
    %v522 = vadd.f32 %v521, 1.0
    %v523 = vmul.f32 %v522, %v396
    %v524 = vand.u32 2147483647, %v396
    %vm525 = vcmp.lt.f32.partialorder %v524, 0.0004427343
    %v526 = vsel %vm525, %v523, %v520
    %v527 = vadd.f32 %v398, 1.0
    %v528 = vlog2.pop %v527
    %v529 = vmul.f32 %v528, 0.6931472
    %v530 = vmul.f32 -0.5, %v398
    %v531 = vadd.f32 %v530, 1.0
    %v532 = vmul.f32 %v531, %v398
    %v533 = vand.u32 2147483647, %v398
    %vm534 = vcmp.lt.f32.partialorder %v533, 0.0004427343
    %v535 = vsel %vm534, %v532, %v529
    %v536 = vadd.f32 %v400, 1.0
    %v537 = vlog2.pop %v536
    %v538 = vmul.f32 %v537, 0.6931472
    %v539 = vmul.f32 -0.5, %v400
    %v540 = vadd.f32 %v539, 1.0
    %v541 = vmul.f32 %v540, %v400
    %v542 = vand.u32 2147483647, %v400
    %vm543 = vcmp.lt.f32.partialorder %v542, 0.0004427343
    %v544 = vsel %vm543, %v541, %v538
    %v545 = vsel %vm353, %v321, %v409
    %v546 = vsel %vm354, %v322, %v418
    %v547 = vsel %vm355, %v323, %v427
    %v548 = vsel %vm356, %v324, %v436
    %v549 = vsel %vm357, %v325, %v445
    %v550 = vsel %vm358, %v326, %v454
    %v551 = vsel %vm359, %v327, %v463
    %v552 = vsel %vm360, %v328, %v472
    %v553 = vsel %vm361, %v329, %v481
    %v554 = vsel %vm362, %v330, %v490
    %v555 = vsel %vm363, %v331, %v499
    %v556 = vsel %vm364, %v332, %v508
    %v557 = vsel %vm365, %v333, %v517
    %v558 = vsel %vm366, %v334, %v526
    %v559 = vsel %vm367, %v335, %v535
    %v560 = vsel %vm368, %v336, %v544
    %v561 = vld [vmem:[%s5] sm:$0xf]
    %v562 = vld [vmem:[%s5 + $0x4] sm:$0xf]
    %v563 = vld [vmem:[%s5 + $0x8] sm:$0xf]
    %v564 = vld [vmem:[%s5 + $0xc] sm:$0xf]
    %v565 = vld [vmem:[%s5 + $0x10] sm:$0xf]
    %v566 = vld [vmem:[%s5 + $0x14] sm:$0xf]
    %v567 = vld [vmem:[%s5 + $0x18] sm:$0xf]
    %v568 = vld [vmem:[%s5 + $0x1c] sm:$0xf]
    %v569 = vpack.c.bf16 %v547, %v545
    %v570 = vpack.c.bf16 %v548, %v546
    %v571 = vpack.c.bf16 %v551, %v549
    %v572 = vpack.c.bf16 %v552, %v550
    %v573 = vpack.c.bf16 %v555, %v553
    %v574 = vpack.c.bf16 %v556, %v554
    %v575 = vpack.c.bf16 %v559, %v557
    %v576 = vpack.c.bf16 %v560, %v558
    %v577 = vld [vmem:[%s6] sm:$0xff]
    %v578 = vld [vmem:[%s6 + $0x8] sm:$0xff]
    %v579 = vld [vmem:[%s6 + $0x10] sm:$0xff]
    %v580 = vld [vmem:[%s6 + $0x18] sm:$0xff]
    %v581 = vld [vmem:[%s6 + $0x20] sm:$0xff]
    %v582 = vld [vmem:[%s6 + $0x28] sm:$0xff]
    %v583 = vld [vmem:[%s6 + $0x30] sm:$0xff]
    %v584 = vld [vmem:[%s6 + $0x38] sm:$0xff]
    %586 = vset.pattern.permute.xlu0 0
    %587 = vperm.xlu0 %586, %v577
    %v588 = vpop.permute.xlu0 %587
    %591 = vset.pattern.permute.xlu0 0
    %592 = vperm.xlu0 %591, %v578
    %v593 = vpop.permute.xlu0 %592
    %596 = vset.pattern.permute.xlu0 0
    %597 = vperm.xlu0 %596, %v579
    %v598 = vpop.permute.xlu0 %597
    %601 = vset.pattern.permute.xlu0 0
    %602 = vperm.xlu0 %601, %v580
    %v603 = vpop.permute.xlu0 %602
    %606 = vset.pattern.permute.xlu0 0
    %607 = vperm.xlu0 %606, %v581
    %v608 = vpop.permute.xlu0 %607
    %611 = vset.pattern.permute.xlu0 0
    %612 = vperm.xlu0 %611, %v582
    %v613 = vpop.permute.xlu0 %612
    %616 = vset.pattern.permute.xlu0 0
    %617 = vperm.xlu0 %616, %v583
    %v618 = vpop.permute.xlu0 %617
    %621 = vset.pattern.permute.xlu0 0
    %622 = vperm.xlu0 %621, %v584
    %v623 = vpop.permute.xlu0 %622
    %v633 = vunpack.c.l.b16 %v561
    %v634 = vunpack.c.l.b16 %v562
    %v635 = vunpack.c.l.b16 %v563
    %v636 = vunpack.c.l.b16 %v564
    %v637 = vunpack.c.l.b16 %v565
    %v638 = vunpack.c.l.b16 %v566
    %v639 = vunpack.c.l.b16 %v567
    %v640 = vunpack.c.l.b16 %v568
    %v641 = vpack.c.b16 %v634, %v633
    %v642 = vpack.c.b16 %v636, %v635
    %v643 = vpack.c.b16 %v638, %v637
    %v644 = vpack.c.b16 %v640, %v639
    %vm645 = vcmask 523264
    %v647 = vsel %vm645, %v641, 0
    %v650 = vsel %vm645, %v642, 0
    %v653 = vsel %vm645, %v643, 0
    %v656 = vsel %vm645, %v644, 0
    %658 = vmatprep.subr.bf16.mxu0 %v570
    %659 = vmatpush1.bf16.msra.mxu0 %v569
    %660 = vmatprep.subr.bf16.mxu0 %v572
    %661 = vmatpush1.bf16.msra.mxu0 %v571
    %662 = vmatprep.subr.bf16.mxu0 %v574
    %663 = vmatpush1.bf16.msra.mxu0 %v573
    %664 = vmatprep.subr.bf16.mxu0 %v576
    %665 = vmatpush1.bf16.msra.mxu0 %v575
    %666 = vmatprep.subr.bf16.mxu0 0
    %667 = vmatpush1.bf16.msra.mxu0 0
    %668 = vmatprep.subr.bf16.mxu0 0
    %669 = vmatpush1.bf16.msra.mxu0 0
    %670 = vmatprep.subr.bf16.mxu0 0
    %671 = vmatpush1.bf16.msra.mxu0 0
    %672 = vmatprep.subr.bf16.mxu0 0
    %673 = vmatpush1.bf16.msra.mxu0 0
    %674 = vmatprep.subr.bf16.mxu0 0
    %675 = vmatpush1.bf16.msra.mxu0 0
    %676 = vmatprep.subr.bf16.mxu0 0
    %677 = vmatpush1.bf16.msra.mxu0 0
    %678 = vmatprep.subr.bf16.mxu0 0
    %679 = vmatpush1.bf16.msra.mxu0 0
    %680 = vmatprep.subr.bf16.mxu0 0
    %681 = vmatpush1.bf16.msra.mxu0 0
    %682 = vmatprep.subr.bf16.mxu0 0
    %683 = vmatpush1.bf16.msra.mxu0 0
    %684 = vmatprep.subr.bf16.mxu0 0
    %685 = vmatpush1.bf16.msra.mxu0 0
    %686 = vmatprep.subr.bf16.mxu0 0
    %687 = vmatpush1.bf16.msra.mxu0 0
    %688 = vmatprep.subr.bf16.mxu0 0
    %689 = vmatpush1.bf16.msra.mxu0 0
    %690 = vmatprep.mubr.bf16.mxu0 0
    %691 = vmatmul.mubr.bf16.gmra.mrb[0].mxu0 %v647
    %v692 = vpop.f32.mrb[0].mxu0
    %v693 = vadd.f32 %v588, %v692
    %v694 = vpop.f32.mrb[0].mxu0
    %v695 = vadd.f32 %v588, %v694
    %v696 = vpop.f32.mrb[0].mxu0
    %v697 = vadd.f32 %v593, %v696
    %v698 = vpop.f32.mrb[0].mxu0
    %v699 = vadd.f32 %v593, %v698
    %700 = vmatprep.mubr.bf16.mxu0 0
    %701 = vmatmul.mubr.bf16.gmra.mrb[0].mxu0 %v650
    %v702 = vpop.f32.mrb[0].mxu0
    %v703 = vadd.f32 %v598, %v702
    %v704 = vpop.f32.mrb[0].mxu0
    %v705 = vadd.f32 %v598, %v704
    %v706 = vpop.f32.mrb[0].mxu0
    %v707 = vadd.f32 %v603, %v706
    %v708 = vpop.f32.mrb[0].mxu0
    %v709 = vadd.f32 %v603, %v708
    %710 = vmatprep.mubr.bf16.mxu0 0
    %711 = vmatmul.mubr.bf16.gmra.mrb[0].mxu0 %v653
    %v712 = vpop.f32.mrb[0].mxu0
    %v713 = vadd.f32 %v608, %v712
    %v714 = vpop.f32.mrb[0].mxu0
    %v715 = vadd.f32 %v608, %v714
    %v716 = vpop.f32.mrb[0].mxu0
    %v717 = vadd.f32 %v613, %v716
    %v718 = vpop.f32.mrb[0].mxu0
    %v719 = vadd.f32 %v613, %v718
    %720 = vmatprep.mubr.bf16.mxu0 0
    %721 = vmatmul.mubr.bf16.gmra.mrb[0].mxu0 %v656
    %v722 = vpop.f32.mrb[0].mxu0
    %v723 = vadd.f32 %v618, %v722
    %v724 = vpop.f32.mrb[0].mxu0
    %v725 = vadd.f32 %v618, %v724
    %v726 = vpop.f32.mrb[0].mxu0
    %v727 = vadd.f32 %v623, %v726
    %v728 = vpop.f32.mrb[0].mxu0
    %v729 = vadd.f32 %v623, %v728
    %730 = vdwg.mxu0
    %v731 = vmin.f32 %v693, 20.0
    %v732 = vmin.f32 %v695, 20.0
    %v733 = vmin.f32 %v697, 20.0
    %v734 = vmin.f32 %v699, 20.0
    %v735 = vmin.f32 %v703, 20.0
    %v736 = vmin.f32 %v705, 20.0
    %v737 = vmin.f32 %v707, 20.0
    %v738 = vmin.f32 %v709, 20.0
    %v739 = vmin.f32 %v713, 20.0
    %v740 = vmin.f32 %v715, 20.0
    %v741 = vmin.f32 %v717, 20.0
    %v742 = vmin.f32 %v719, 20.0
    %v743 = vmin.f32 %v723, 20.0
    %v744 = vmin.f32 %v725, 20.0
    %v745 = vmin.f32 %v727, 20.0
    %v746 = vmin.f32 %v729, 20.0
    %vm747 = vcmp.gt.f32.partialorder %v693, 20.0
    %vm748 = vcmp.gt.f32.partialorder %v695, 20.0
    %vm749 = vcmp.gt.f32.partialorder %v697, 20.0
    %vm750 = vcmp.gt.f32.partialorder %v699, 20.0
    %vm751 = vcmp.gt.f32.partialorder %v703, 20.0
    %vm752 = vcmp.gt.f32.partialorder %v705, 20.0
    %vm753 = vcmp.gt.f32.partialorder %v707, 20.0
    %vm754 = vcmp.gt.f32.partialorder %v709, 20.0
    %vm755 = vcmp.gt.f32.partialorder %v713, 20.0
    %vm756 = vcmp.gt.f32.partialorder %v715, 20.0
    %vm757 = vcmp.gt.f32.partialorder %v717, 20.0
    %vm758 = vcmp.gt.f32.partialorder %v719, 20.0
    %vm759 = vcmp.gt.f32.partialorder %v723, 20.0
    %vm760 = vcmp.gt.f32.partialorder %v725, 20.0
    %vm761 = vcmp.gt.f32.partialorder %v727, 20.0
    %vm762 = vcmp.gt.f32.partialorder %v729, 20.0
    %v763 = vmul.f32 %v731, 1.442695
    %v764 = vpow.pop %v763
    %v765 = vmul.f32 %v732, 1.442695
    %v766 = vpow.pop %v765
    %v767 = vmul.f32 %v733, 1.442695
    %v768 = vpow.pop %v767
    %v769 = vmul.f32 %v734, 1.442695
    %v770 = vpow.pop %v769
    %v771 = vmul.f32 %v735, 1.442695
    %v772 = vpow.pop %v771
    %v773 = vmul.f32 %v736, 1.442695
    %v774 = vpow.pop %v773
    %v775 = vmul.f32 %v737, 1.442695
    %v776 = vpow.pop %v775
    %v777 = vmul.f32 %v738, 1.442695
    %v778 = vpow.pop %v777
    %v779 = vmul.f32 %v739, 1.442695
    %v780 = vpow.pop %v779
    %v781 = vmul.f32 %v740, 1.442695
    %v782 = vpow.pop %v781
    %v783 = vmul.f32 %v741, 1.442695
    %v784 = vpow.pop %v783
    %v785 = vmul.f32 %v742, 1.442695
    %v786 = vpow.pop %v785
    %v787 = vmul.f32 %v743, 1.442695
    %v788 = vpow.pop %v787
    %v789 = vmul.f32 %v744, 1.442695
    %v790 = vpow.pop %v789
    %v791 = vmul.f32 %v745, 1.442695
    %v792 = vpow.pop %v791
    %v793 = vmul.f32 %v746, 1.442695
    %v794 = vpow.pop %v793
    %v795 = vadd.f32 %v764, 1.0
    %v796 = vlog2.pop %v795
    %v797 = vmul.f32 %v796, 0.6931472
    %v798 = vmul.f32 -0.5, %v764
    %v799 = vadd.f32 %v798, 1.0
    %v800 = vmul.f32 %v799, %v764
    %v801 = vand.u32 2147483647, %v764
    %vm802 = vcmp.lt.f32.partialorder %v801, 0.0004427343
    %v803 = vsel %vm802, %v800, %v797
    %v804 = vadd.f32 %v766, 1.0
    %v805 = vlog2.pop %v804
    %v806 = vmul.f32 %v805, 0.6931472
    %v807 = vmul.f32 -0.5, %v766
    %v808 = vadd.f32 %v807, 1.0
    %v809 = vmul.f32 %v808, %v766
    %v810 = vand.u32 2147483647, %v766
    %vm811 = vcmp.lt.f32.partialorder %v810, 0.0004427343
    %v812 = vsel %vm811, %v809, %v806
    %v813 = vadd.f32 %v768, 1.0
    %v814 = vlog2.pop %v813
    %v815 = vmul.f32 %v814, 0.6931472
    %v816 = vmul.f32 -0.5, %v768
    %v817 = vadd.f32 %v816, 1.0
    %v818 = vmul.f32 %v817, %v768
    %v819 = vand.u32 2147483647, %v768
    %vm820 = vcmp.lt.f32.partialorder %v819, 0.0004427343
    %v821 = vsel %vm820, %v818, %v815
    %v822 = vadd.f32 %v770, 1.0
    %v823 = vlog2.pop %v822
    %v824 = vmul.f32 %v823, 0.6931472
    %v825 = vmul.f32 -0.5, %v770
    %v826 = vadd.f32 %v825, 1.0
    %v827 = vmul.f32 %v826, %v770
    %v828 = vand.u32 2147483647, %v770
    %vm829 = vcmp.lt.f32.partialorder %v828, 0.0004427343
    %v830 = vsel %vm829, %v827, %v824
    %v831 = vadd.f32 %v772, 1.0
    %v832 = vlog2.pop %v831
    %v833 = vmul.f32 %v832, 0.6931472
    %v834 = vmul.f32 -0.5, %v772
    %v835 = vadd.f32 %v834, 1.0
    %v836 = vmul.f32 %v835, %v772
    %v837 = vand.u32 2147483647, %v772
    %vm838 = vcmp.lt.f32.partialorder %v837, 0.0004427343
    %v839 = vsel %vm838, %v836, %v833
    %v840 = vadd.f32 %v774, 1.0
    %v841 = vlog2.pop %v840
    %v842 = vmul.f32 %v841, 0.6931472
    %v843 = vmul.f32 -0.5, %v774
    %v844 = vadd.f32 %v843, 1.0
    %v845 = vmul.f32 %v844, %v774
    %v846 = vand.u32 2147483647, %v774
    %vm847 = vcmp.lt.f32.partialorder %v846, 0.0004427343
    %v848 = vsel %vm847, %v845, %v842
    %v849 = vadd.f32 %v776, 1.0
    %v850 = vlog2.pop %v849
    %v851 = vmul.f32 %v850, 0.6931472
    %v852 = vmul.f32 -0.5, %v776
    %v853 = vadd.f32 %v852, 1.0
    %v854 = vmul.f32 %v853, %v776
    %v855 = vand.u32 2147483647, %v776
    %vm856 = vcmp.lt.f32.partialorder %v855, 0.0004427343
    %v857 = vsel %vm856, %v854, %v851
    %v858 = vadd.f32 %v778, 1.0
    %v859 = vlog2.pop %v858
    %v860 = vmul.f32 %v859, 0.6931472
    %v861 = vmul.f32 -0.5, %v778
    %v862 = vadd.f32 %v861, 1.0
    %v863 = vmul.f32 %v862, %v778
    %v864 = vand.u32 2147483647, %v778
    %vm865 = vcmp.lt.f32.partialorder %v864, 0.0004427343
    %v866 = vsel %vm865, %v863, %v860
    %v867 = vadd.f32 %v780, 1.0
    %v868 = vlog2.pop %v867
    %v869 = vmul.f32 %v868, 0.6931472
    %v870 = vmul.f32 -0.5, %v780
    %v871 = vadd.f32 %v870, 1.0
    %v872 = vmul.f32 %v871, %v780
    %v873 = vand.u32 2147483647, %v780
    %vm874 = vcmp.lt.f32.partialorder %v873, 0.0004427343
    %v875 = vsel %vm874, %v872, %v869
    %v876 = vadd.f32 %v782, 1.0
    %v877 = vlog2.pop %v876
    %v878 = vmul.f32 %v877, 0.6931472
    %v879 = vmul.f32 -0.5, %v782
    %v880 = vadd.f32 %v879, 1.0
    %v881 = vmul.f32 %v880, %v782
    %v882 = vand.u32 2147483647, %v782
    %vm883 = vcmp.lt.f32.partialorder %v882, 0.0004427343
    %v884 = vsel %vm883, %v881, %v878
    %v885 = vadd.f32 %v784, 1.0
    %v886 = vlog2.pop %v885
    %v887 = vmul.f32 %v886, 0.6931472
    %v888 = vmul.f32 -0.5, %v784
    %v889 = vadd.f32 %v888, 1.0
    %v890 = vmul.f32 %v889, %v784
    %v891 = vand.u32 2147483647, %v784
    %vm892 = vcmp.lt.f32.partialorder %v891, 0.0004427343
    %v893 = vsel %vm892, %v890, %v887
    %v894 = vadd.f32 %v786, 1.0
    %v895 = vlog2.pop %v894
    %v896 = vmul.f32 %v895, 0.6931472
    %v897 = vmul.f32 -0.5, %v786
    %v898 = vadd.f32 %v897, 1.0
    %v899 = vmul.f32 %v898, %v786
    %v900 = vand.u32 2147483647, %v786
    %vm901 = vcmp.lt.f32.partialorder %v900, 0.0004427343
    %v902 = vsel %vm901, %v899, %v896
    %v903 = vadd.f32 %v788, 1.0
    %v904 = vlog2.pop %v903
    %v905 = vmul.f32 %v904, 0.6931472
    %v906 = vmul.f32 -0.5, %v788
    %v907 = vadd.f32 %v906, 1.0
    %v908 = vmul.f32 %v907, %v788
    %v909 = vand.u32 2147483647, %v788
    %vm910 = vcmp.lt.f32.partialorder %v909, 0.0004427343
    %v911 = vsel %vm910, %v908, %v905
    %v912 = vadd.f32 %v790, 1.0
    %v913 = vlog2.pop %v912
    %v914 = vmul.f32 %v913, 0.6931472
    %v915 = vmul.f32 -0.5, %v790
    %v916 = vadd.f32 %v915, 1.0
    %v917 = vmul.f32 %v916, %v790
    %v918 = vand.u32 2147483647, %v790
    %vm919 = vcmp.lt.f32.partialorder %v918, 0.0004427343
    %v920 = vsel %vm919, %v917, %v914
    %v921 = vadd.f32 %v792, 1.0
    %v922 = vlog2.pop %v921
    %v923 = vmul.f32 %v922, 0.6931472
    %v924 = vmul.f32 -0.5, %v792
    %v925 = vadd.f32 %v924, 1.0
    %v926 = vmul.f32 %v925, %v792
    %v927 = vand.u32 2147483647, %v792
    %vm928 = vcmp.lt.f32.partialorder %v927, 0.0004427343
    %v929 = vsel %vm928, %v926, %v923
    %v930 = vadd.f32 %v794, 1.0
    %v931 = vlog2.pop %v930
    %v932 = vmul.f32 %v931, 0.6931472
    %v933 = vmul.f32 -0.5, %v794
    %v934 = vadd.f32 %v933, 1.0
    %v935 = vmul.f32 %v934, %v794
    %v936 = vand.u32 2147483647, %v794
    %vm937 = vcmp.lt.f32.partialorder %v936, 0.0004427343
    %v938 = vsel %vm937, %v935, %v932
    %v939 = vsel %vm747, %v693, %v803
    %v940 = vsel %vm748, %v695, %v812
    %v941 = vsel %vm749, %v697, %v821
    %v942 = vsel %vm750, %v699, %v830
    %v943 = vsel %vm751, %v703, %v839
    %v944 = vsel %vm752, %v705, %v848
    %v945 = vsel %vm753, %v707, %v857
    %v946 = vsel %vm754, %v709, %v866
    %v947 = vsel %vm755, %v713, %v875
    %v948 = vsel %vm756, %v715, %v884
    %v949 = vsel %vm757, %v717, %v893
    %v950 = vsel %vm758, %v719, %v902
    %v951 = vsel %vm759, %v723, %v911
    %v952 = vsel %vm760, %v725, %v920
    %v953 = vsel %vm761, %v727, %v929
    %v954 = vsel %vm762, %v729, %v938
    %v955 = vld [vmem:[%s7] sm:$0xf]
    %v956 = vld [vmem:[%s7 + $0x4] sm:$0xf]
    %v957 = vld [vmem:[%s7 + $0x8] sm:$0xf]
    %v958 = vld [vmem:[%s7 + $0xc] sm:$0xf]
    %v959 = vld [vmem:[%s7 + $0x10] sm:$0xf]
    %v960 = vld [vmem:[%s7 + $0x14] sm:$0xf]
    %v961 = vld [vmem:[%s7 + $0x18] sm:$0xf]
    %v962 = vld [vmem:[%s7 + $0x1c] sm:$0xf]
    %v963 = vpack.c.bf16 %v941, %v939
    %v964 = vpack.c.bf16 %v942, %v940
    %v965 = vpack.c.bf16 %v945, %v943
    %v966 = vpack.c.bf16 %v946, %v944
    %v967 = vpack.c.bf16 %v949, %v947
    %v968 = vpack.c.bf16 %v950, %v948
    %v969 = vpack.c.bf16 %v953, %v951
    %v970 = vpack.c.bf16 %v954, %v952
    %v971 = vld [vmem:[%s8] sm:$0xff]
    %v972 = vld [vmem:[%s8 + $0x8] sm:$0xff]
    %v973 = vld [vmem:[%s8 + $0x10] sm:$0xff]
    %v974 = vld [vmem:[%s8 + $0x18] sm:$0xff]
    %v975 = vld [vmem:[%s8 + $0x20] sm:$0xff]
    %v976 = vld [vmem:[%s8 + $0x28] sm:$0xff]
    %v977 = vld [vmem:[%s8 + $0x30] sm:$0xff]
    %v978 = vld [vmem:[%s8 + $0x38] sm:$0xff]
    %980 = vset.pattern.permute.xlu0 0
    %981 = vperm.xlu0 %980, %v971
    %v982 = vpop.permute.xlu0 %981
    %985 = vset.pattern.permute.xlu0 0
    %986 = vperm.xlu0 %985, %v972
    %v987 = vpop.permute.xlu0 %986
    %990 = vset.pattern.permute.xlu0 0
    %991 = vperm.xlu0 %990, %v973
    %v992 = vpop.permute.xlu0 %991
    %995 = vset.pattern.permute.xlu0 0
    %996 = vperm.xlu0 %995, %v974
    %v997 = vpop.permute.xlu0 %996
    %1000 = vset.pattern.permute.xlu0 0
    %1001 = vperm.xlu0 %1000, %v975
    %v1002 = vpop.permute.xlu0 %1001
    %1005 = vset.pattern.permute.xlu0 0
    %1006 = vperm.xlu0 %1005, %v976
    %v1007 = vpop.permute.xlu0 %1006
    %1010 = vset.pattern.permute.xlu0 0
    %1011 = vperm.xlu0 %1010, %v977
    %v1012 = vpop.permute.xlu0 %1011
    %1015 = vset.pattern.permute.xlu0 0
    %1016 = vperm.xlu0 %1015, %v978
    %v1017 = vpop.permute.xlu0 %1016
    %v1027 = vunpack.c.l.b16 %v955
    %v1028 = vunpack.c.l.b16 %v956
    %v1029 = vunpack.c.l.b16 %v957
    %v1030 = vunpack.c.l.b16 %v958
    %v1031 = vunpack.c.l.b16 %v959
    %v1032 = vunpack.c.l.b16 %v960
    %v1033 = vunpack.c.l.b16 %v961
    %v1034 = vunpack.c.l.b16 %v962
    %v1035 = vpack.c.b16 %v1028, %v1027
    %v1036 = vpack.c.b16 %v1030, %v1029
    %v1037 = vpack.c.b16 %v1032, %v1031
    %v1038 = vpack.c.b16 %v1034, %v1033
    %v1040 = vsel %vm645, %v1035, 0
    %v1043 = vsel %vm645, %v1036, 0
    %v1046 = vsel %vm645, %v1037, 0
    %v1049 = vsel %vm645, %v1038, 0
    %1051 = vmatprep.subr.bf16.mxu0 %v964
    %1052 = vmatpush1.bf16.msra.mxu0 %v963
    %1053 = vmatprep.subr.bf16.mxu0 %v966
    %1054 = vmatpush1.bf16.msra.mxu0 %v965
    %1055 = vmatprep.subr.bf16.mxu0 %v968
    %1056 = vmatpush1.bf16.msra.mxu0 %v967
    %1057 = vmatprep.subr.bf16.mxu0 %v970
    %1058 = vmatpush1.bf16.msra.mxu0 %v969
    %1059 = vmatprep.subr.bf16.mxu0 0
    %1060 = vmatpush1.bf16.msra.mxu0 0
    %1061 = vmatprep.subr.bf16.mxu0 0
    %1062 = vmatpush1.bf16.msra.mxu0 0
    %1063 = vmatprep.subr.bf16.mxu0 0
    %1064 = vmatpush1.bf16.msra.mxu0 0
    %1065 = vmatprep.subr.bf16.mxu0 0
    %1066 = vmatpush1.bf16.msra.mxu0 0
    %1067 = vmatprep.subr.bf16.mxu0 0
    %1068 = vmatpush1.bf16.msra.mxu0 0
    %1069 = vmatprep.subr.bf16.mxu0 0
    %1070 = vmatpush1.bf16.msra.mxu0 0
    %1071 = vmatprep.subr.bf16.mxu0 0
    %1072 = vmatpush1.bf16.msra.mxu0 0
    %1073 = vmatprep.subr.bf16.mxu0 0
    %1074 = vmatpush1.bf16.msra.mxu0 0
    %1075 = vmatprep.subr.bf16.mxu0 0
    %1076 = vmatpush1.bf16.msra.mxu0 0
    %1077 = vmatprep.subr.bf16.mxu0 0
    %1078 = vmatpush1.bf16.msra.mxu0 0
    %1079 = vmatprep.subr.bf16.mxu0 0
    %1080 = vmatpush1.bf16.msra.mxu0 0
    %1081 = vmatprep.subr.bf16.mxu0 0
    %1082 = vmatpush1.bf16.msra.mxu0 0
    %1083 = vmatprep.mubr.bf16.mxu0 0
    %1084 = vmatmul.mubr.bf16.gmra.mrb[0].mxu0 %v1040
    %v1085 = vpop.f32.mrb[0].mxu0
    %v1086 = vadd.f32 %v982, %v1085
    %v1087 = vpop.f32.mrb[0].mxu0
    %v1088 = vadd.f32 %v982, %v1087
    %v1089 = vpop.f32.mrb[0].mxu0
    %v1090 = vadd.f32 %v987, %v1089
    %v1091 = vpop.f32.mrb[0].mxu0
    %v1092 = vadd.f32 %v987, %v1091
    %1093 = vmatprep.mubr.bf16.mxu0 0
    %1094 = vmatmul.mubr.bf16.gmra.mrb[0].mxu0 %v1043
    %v1095 = vpop.f32.mrb[0].mxu0
    %v1096 = vadd.f32 %v992, %v1095
    %v1097 = vpop.f32.mrb[0].mxu0
    %v1098 = vadd.f32 %v992, %v1097
    %v1099 = vpop.f32.mrb[0].mxu0
    %v1100 = vadd.f32 %v997, %v1099
    %v1101 = vpop.f32.mrb[0].mxu0
    %v1102 = vadd.f32 %v997, %v1101
    %1103 = vmatprep.mubr.bf16.mxu0 0
    %1104 = vmatmul.mubr.bf16.gmra.mrb[0].mxu0 %v1046
    %v1105 = vpop.f32.mrb[0].mxu0
    %v1106 = vadd.f32 %v1002, %v1105
    %v1107 = vpop.f32.mrb[0].mxu0
    %v1108 = vadd.f32 %v1002, %v1107
    %v1109 = vpop.f32.mrb[0].mxu0
    %v1110 = vadd.f32 %v1007, %v1109
    %v1111 = vpop.f32.mrb[0].mxu0
    %v1112 = vadd.f32 %v1007, %v1111
    %1113 = vmatprep.mubr.bf16.mxu0 0
    %1114 = vmatmul.mubr.bf16.gmra.mrb[0].mxu0 %v1049
    %v1115 = vpop.f32.mrb[0].mxu0
    %v1116 = vadd.f32 %v1012, %v1115
    %v1117 = vpop.f32.mrb[0].mxu0
    %v1118 = vadd.f32 %v1012, %v1117
    %v1119 = vpop.f32.mrb[0].mxu0
    %v1120 = vadd.f32 %v1017, %v1119
    %v1121 = vpop.f32.mrb[0].mxu0
    %v1122 = vadd.f32 %v1017, %v1121
    %1123 = vdwg.mxu0
    %v1124 = vmin.f32 %v1086, 20.0
    %v1125 = vmin.f32 %v1088, 20.0
    %v1126 = vmin.f32 %v1090, 20.0
    %v1127 = vmin.f32 %v1092, 20.0
    %v1128 = vmin.f32 %v1096, 20.0
    %v1129 = vmin.f32 %v1098, 20.0
    %v1130 = vmin.f32 %v1100, 20.0
    %v1131 = vmin.f32 %v1102, 20.0
    %v1132 = vmin.f32 %v1106, 20.0
    %v1133 = vmin.f32 %v1108, 20.0
    %v1134 = vmin.f32 %v1110, 20.0
    %v1135 = vmin.f32 %v1112, 20.0
    %v1136 = vmin.f32 %v1116, 20.0
    %v1137 = vmin.f32 %v1118, 20.0
    %v1138 = vmin.f32 %v1120, 20.0
    %v1139 = vmin.f32 %v1122, 20.0
    %vm1140 = vcmp.gt.f32.partialorder %v1086, 20.0
    %vm1141 = vcmp.gt.f32.partialorder %v1088, 20.0
    %vm1142 = vcmp.gt.f32.partialorder %v1090, 20.0
    %vm1143 = vcmp.gt.f32.partialorder %v1092, 20.0
    %vm1144 = vcmp.gt.f32.partialorder %v1096, 20.0
    %vm1145 = vcmp.gt.f32.partialorder %v1098, 20.0
    %vm1146 = vcmp.gt.f32.partialorder %v1100, 20.0
    %vm1147 = vcmp.gt.f32.partialorder %v1102, 20.0
    %vm1148 = vcmp.gt.f32.partialorder %v1106, 20.0
    %vm1149 = vcmp.gt.f32.partialorder %v1108, 20.0
    %vm1150 = vcmp.gt.f32.partialorder %v1110, 20.0
    %vm1151 = vcmp.gt.f32.partialorder %v1112, 20.0
    %vm1152 = vcmp.gt.f32.partialorder %v1116, 20.0
    %vm1153 = vcmp.gt.f32.partialorder %v1118, 20.0
    %vm1154 = vcmp.gt.f32.partialorder %v1120, 20.0
    %vm1155 = vcmp.gt.f32.partialorder %v1122, 20.0
    %v1156 = vmul.f32 %v1124, 1.442695
    %v1157 = vpow.pop %v1156
    %v1158 = vmul.f32 %v1125, 1.442695
    %v1159 = vpow.pop %v1158
    %v1160 = vmul.f32 %v1126, 1.442695
    %v1161 = vpow.pop %v1160
    %v1162 = vmul.f32 %v1127, 1.442695
    %v1163 = vpow.pop %v1162
    %v1164 = vmul.f32 %v1128, 1.442695
    %v1165 = vpow.pop %v1164
    %v1166 = vmul.f32 %v1129, 1.442695
    %v1167 = vpow.pop %v1166
    %v1168 = vmul.f32 %v1130, 1.442695
    %v1169 = vpow.pop %v1168
    %v1170 = vmul.f32 %v1131, 1.442695
    %v1171 = vpow.pop %v1170
    %v1172 = vmul.f32 %v1132, 1.442695
    %v1173 = vpow.pop %v1172
    %v1174 = vmul.f32 %v1133, 1.442695
    %v1175 = vpow.pop %v1174
    %v1176 = vmul.f32 %v1134, 1.442695
    %v1177 = vpow.pop %v1176
    %v1178 = vmul.f32 %v1135, 1.442695
    %v1179 = vpow.pop %v1178
    %v1180 = vmul.f32 %v1136, 1.442695
    %v1181 = vpow.pop %v1180
    %v1182 = vmul.f32 %v1137, 1.442695
    %v1183 = vpow.pop %v1182
    %v1184 = vmul.f32 %v1138, 1.442695
    %v1185 = vpow.pop %v1184
    %v1186 = vmul.f32 %v1139, 1.442695
    %v1187 = vpow.pop %v1186
    %v1188 = vadd.f32 %v1157, 1.0
    %v1189 = vlog2.pop %v1188
    %v1190 = vmul.f32 %v1189, 0.6931472
    %v1191 = vmul.f32 -0.5, %v1157
    %v1192 = vadd.f32 %v1191, 1.0
    %v1193 = vmul.f32 %v1192, %v1157
    %v1194 = vand.u32 2147483647, %v1157
    %vm1195 = vcmp.lt.f32.partialorder %v1194, 0.0004427343
    %v1196 = vsel %vm1195, %v1193, %v1190
    %v1197 = vadd.f32 %v1159, 1.0
    %v1198 = vlog2.pop %v1197
    %v1199 = vmul.f32 %v1198, 0.6931472
    %v1200 = vmul.f32 -0.5, %v1159
    %v1201 = vadd.f32 %v1200, 1.0
    %v1202 = vmul.f32 %v1201, %v1159
    %v1203 = vand.u32 2147483647, %v1159
    %vm1204 = vcmp.lt.f32.partialorder %v1203, 0.0004427343
    %v1205 = vsel %vm1204, %v1202, %v1199
    %v1206 = vadd.f32 %v1161, 1.0
    %v1207 = vlog2.pop %v1206
    %v1208 = vmul.f32 %v1207, 0.6931472
    %v1209 = vmul.f32 -0.5, %v1161
    %v1210 = vadd.f32 %v1209, 1.0
    %v1211 = vmul.f32 %v1210, %v1161
    %v1212 = vand.u32 2147483647, %v1161
    %vm1213 = vcmp.lt.f32.partialorder %v1212, 0.0004427343
    %v1214 = vsel %vm1213, %v1211, %v1208
    %v1215 = vadd.f32 %v1163, 1.0
    %v1216 = vlog2.pop %v1215
    %v1217 = vmul.f32 %v1216, 0.6931472
    %v1218 = vmul.f32 -0.5, %v1163
    %v1219 = vadd.f32 %v1218, 1.0
    %v1220 = vmul.f32 %v1219, %v1163
    %v1221 = vand.u32 2147483647, %v1163
    %vm1222 = vcmp.lt.f32.partialorder %v1221, 0.0004427343
    %v1223 = vsel %vm1222, %v1220, %v1217
    %v1224 = vadd.f32 %v1165, 1.0
    %v1225 = vlog2.pop %v1224
    %v1226 = vmul.f32 %v1225, 0.6931472
    %v1227 = vmul.f32 -0.5, %v1165
    %v1228 = vadd.f32 %v1227, 1.0
    %v1229 = vmul.f32 %v1228, %v1165
    %v1230 = vand.u32 2147483647, %v1165
    %vm1231 = vcmp.lt.f32.partialorder %v1230, 0.0004427343
    %v1232 = vsel %vm1231, %v1229, %v1226
    %v1233 = vadd.f32 %v1167, 1.0
    %v1234 = vlog2.pop %v1233
    %v1235 = vmul.f32 %v1234, 0.6931472
    %v1236 = vmul.f32 -0.5, %v1167
    %v1237 = vadd.f32 %v1236, 1.0
    %v1238 = vmul.f32 %v1237, %v1167
    %v1239 = vand.u32 2147483647, %v1167
    %vm1240 = vcmp.lt.f32.partialorder %v1239, 0.0004427343
    %v1241 = vsel %vm1240, %v1238, %v1235
    %v1242 = vadd.f32 %v1169, 1.0
    %v1243 = vlog2.pop %v1242
    %v1244 = vmul.f32 %v1243, 0.6931472
    %v1245 = vmul.f32 -0.5, %v1169
    %v1246 = vadd.f32 %v1245, 1.0
    %v1247 = vmul.f32 %v1246, %v1169
    %v1248 = vand.u32 2147483647, %v1169
    %vm1249 = vcmp.lt.f32.partialorder %v1248, 0.0004427343
    %v1250 = vsel %vm1249, %v1247, %v1244
    %v1251 = vadd.f32 %v1171, 1.0
    %v1252 = vlog2.pop %v1251
    %v1253 = vmul.f32 %v1252, 0.6931472
    %v1254 = vmul.f32 -0.5, %v1171
    %v1255 = vadd.f32 %v1254, 1.0
    %v1256 = vmul.f32 %v1255, %v1171
    %v1257 = vand.u32 2147483647, %v1171
    %vm1258 = vcmp.lt.f32.partialorder %v1257, 0.0004427343
    %v1259 = vsel %vm1258, %v1256, %v1253
    %v1260 = vadd.f32 %v1173, 1.0
    %v1261 = vlog2.pop %v1260
    %v1262 = vmul.f32 %v1261, 0.6931472
    %v1263 = vmul.f32 -0.5, %v1173
    %v1264 = vadd.f32 %v1263, 1.0
    %v1265 = vmul.f32 %v1264, %v1173
    %v1266 = vand.u32 2147483647, %v1173
    %vm1267 = vcmp.lt.f32.partialorder %v1266, 0.0004427343
    %v1268 = vsel %vm1267, %v1265, %v1262
    %v1269 = vadd.f32 %v1175, 1.0
    %v1270 = vlog2.pop %v1269
    %v1271 = vmul.f32 %v1270, 0.6931472
    %v1272 = vmul.f32 -0.5, %v1175
    %v1273 = vadd.f32 %v1272, 1.0
    %v1274 = vmul.f32 %v1273, %v1175
    %v1275 = vand.u32 2147483647, %v1175
    %vm1276 = vcmp.lt.f32.partialorder %v1275, 0.0004427343
    %v1277 = vsel %vm1276, %v1274, %v1271
    %v1278 = vadd.f32 %v1177, 1.0
    %v1279 = vlog2.pop %v1278
    %v1280 = vmul.f32 %v1279, 0.6931472
    %v1281 = vmul.f32 -0.5, %v1177
    %v1282 = vadd.f32 %v1281, 1.0
    %v1283 = vmul.f32 %v1282, %v1177
    %v1284 = vand.u32 2147483647, %v1177
    %vm1285 = vcmp.lt.f32.partialorder %v1284, 0.0004427343
    %v1286 = vsel %vm1285, %v1283, %v1280
    %v1287 = vadd.f32 %v1179, 1.0
    %v1288 = vlog2.pop %v1287
    %v1289 = vmul.f32 %v1288, 0.6931472
    %v1290 = vmul.f32 -0.5, %v1179
    %v1291 = vadd.f32 %v1290, 1.0
    %v1292 = vmul.f32 %v1291, %v1179
    %v1293 = vand.u32 2147483647, %v1179
    %vm1294 = vcmp.lt.f32.partialorder %v1293, 0.0004427343
    %v1295 = vsel %vm1294, %v1292, %v1289
    %v1296 = vadd.f32 %v1181, 1.0
    %v1297 = vlog2.pop %v1296
    %v1298 = vmul.f32 %v1297, 0.6931472
    %v1299 = vmul.f32 -0.5, %v1181
    %v1300 = vadd.f32 %v1299, 1.0
    %v1301 = vmul.f32 %v1300, %v1181
    %v1302 = vand.u32 2147483647, %v1181
    %vm1303 = vcmp.lt.f32.partialorder %v1302, 0.0004427343
    %v1304 = vsel %vm1303, %v1301, %v1298
    %v1305 = vadd.f32 %v1183, 1.0
    %v1306 = vlog2.pop %v1305
    %v1307 = vmul.f32 %v1306, 0.6931472
    %v1308 = vmul.f32 -0.5, %v1183
    %v1309 = vadd.f32 %v1308, 1.0
    %v1310 = vmul.f32 %v1309, %v1183
    %v1311 = vand.u32 2147483647, %v1183
    %vm1312 = vcmp.lt.f32.partialorder %v1311, 0.0004427343
    %v1313 = vsel %vm1312, %v1310, %v1307
    %v1314 = vadd.f32 %v1185, 1.0
    %v1315 = vlog2.pop %v1314
    %v1316 = vmul.f32 %v1315, 0.6931472
    %v1317 = vmul.f32 -0.5, %v1185
    %v1318 = vadd.f32 %v1317, 1.0
    %v1319 = vmul.f32 %v1318, %v1185
    %v1320 = vand.u32 2147483647, %v1185
    %vm1321 = vcmp.lt.f32.partialorder %v1320, 0.0004427343
    %v1322 = vsel %vm1321, %v1319, %v1316
    %v1323 = vadd.f32 %v1187, 1.0
    %v1324 = vlog2.pop %v1323
    %v1325 = vmul.f32 %v1324, 0.6931472
    %v1326 = vmul.f32 -0.5, %v1187
    %v1327 = vadd.f32 %v1326, 1.0
    %v1328 = vmul.f32 %v1327, %v1187
    %v1329 = vand.u32 2147483647, %v1187
    %vm1330 = vcmp.lt.f32.partialorder %v1329, 0.0004427343
    %v1331 = vsel %vm1330, %v1328, %v1325
    %v1332 = vsel %vm1140, %v1086, %v1196
    %v1333 = vsel %vm1141, %v1088, %v1205
    %v1334 = vsel %vm1142, %v1090, %v1214
    %v1335 = vsel %vm1143, %v1092, %v1223
    %v1336 = vsel %vm1144, %v1096, %v1232
    %v1337 = vsel %vm1145, %v1098, %v1241
    %v1338 = vsel %vm1146, %v1100, %v1250
    %v1339 = vsel %vm1147, %v1102, %v1259
    %v1340 = vsel %vm1148, %v1106, %v1268
    %v1341 = vsel %vm1149, %v1108, %v1277
    %v1342 = vsel %vm1150, %v1110, %v1286
    %v1343 = vsel %vm1151, %v1112, %v1295
    %v1344 = vsel %vm1152, %v1116, %v1304
    %v1345 = vsel %vm1153, %v1118, %v1313
    %v1346 = vsel %vm1154, %v1120, %v1322
    %v1347 = vsel %vm1155, %v1122, %v1331
    %v1348 = vld [vmem:[%s9] sm:$0x1]
    %v1349 = vpack.c.bf16 %v1334, %v1332
    %v1350 = vpack.c.bf16 %v1335, %v1333
    %v1351 = vpack.c.bf16 %v1338, %v1336
    %v1352 = vpack.c.bf16 %v1339, %v1337
    %v1353 = vpack.c.bf16 %v1342, %v1340
    %v1354 = vpack.c.bf16 %v1343, %v1341
    %v1355 = vpack.c.bf16 %v1346, %v1344
    %v1356 = vpack.c.bf16 %v1347, %v1345
    %v1357 = vld [vmem:[#allocation2] sm:$0x1]
    %1359 = vset.pattern.permute.xlu0 0
    %1360 = vperm.xlu0 %1359, %v1357
    %v1361 = vpop.permute.xlu0 %1360
    %v1363 = vlaneseq
    %v1364 = vshrl.u32 %v1363, 7
    %v1365 = vsub.s32 0, %v1364
    %v1366 = vrot.slane %v1361, %v1365
    %v1368 = vsel %vm645, %v1348, 0
    %1370 = vmatprep.subr.bf16.mxu0 %v1350
    %1371 = vmatpush1.bf16.msra.mxu0 %v1349
    %1372 = vmatprep.subr.bf16.mxu0 %v1352
    %1373 = vmatpush1.bf16.msra.mxu0 %v1351
    %1374 = vmatprep.subr.bf16.mxu0 %v1354
    %1375 = vmatpush1.bf16.msra.mxu0 %v1353
    %1376 = vmatprep.subr.bf16.mxu0 %v1356
    %1377 = vmatpush1.bf16.msra.mxu0 %v1355
    %1378 = vmatprep.subr.bf16.mxu0 0
    %1379 = vmatpush1.bf16.msra.mxu0 0
    %1380 = vmatprep.subr.bf16.mxu0 0
    %1381 = vmatpush1.bf16.msra.mxu0 0
    %1382 = vmatprep.subr.bf16.mxu0 0
    %1383 = vmatpush1.bf16.msra.mxu0 0
    %1384 = vmatprep.subr.bf16.mxu0 0
    %1385 = vmatpush1.bf16.msra.mxu0 0
    %1386 = vmatprep.subr.bf16.mxu0 0
    %1387 = vmatpush1.bf16.msra.mxu0 0
    %1388 = vmatprep.subr.bf16.mxu0 0
    %1389 = vmatpush1.bf16.msra.mxu0 0
    %1390 = vmatprep.subr.bf16.mxu0 0
    %1391 = vmatpush1.bf16.msra.mxu0 0
    %1392 = vmatprep.subr.bf16.mxu0 0
    %1393 = vmatpush1.bf16.msra.mxu0 0
    %1394 = vmatprep.subr.bf16.mxu0 0
    %1395 = vmatpush1.bf16.msra.mxu0 0
    %1396 = vmatprep.subr.bf16.mxu0 0
    %1397 = vmatpush1.bf16.msra.mxu0 0
    %1398 = vmatprep.subr.bf16.mxu0 0
    %1399 = vmatpush1.bf16.msra.mxu0 0
    %1400 = vmatprep.subr.bf16.mxu0 0
    %1401 = vmatpush1.bf16.msra.mxu0 0
    %1402 = vmatprep.mubr.bf16.mxu0 0
    %1403 = vmatmul.mubr.bf16.gmra.mrb[0].mxu0 %v1368
    %v1404 = vpop.f32.mrb[0].mxu0
    %v1405 = vadd.f32 %v1366, %v1404
    %v1406 = vpop.f32.mrb[0].mxu0
    %v1407 = vadd.f32 %v1366, %v1406
    %v1408 = vpop.f32.mrb[0].mxu0
    %v1409 = vpop.f32.mrb[0].mxu0
    %1410 = vdwg.mxu0
    %v1413 = vcombine.low %v1405, %v1407
    %v1415 = vunpack.c.l.s4 1966171168
    %v1416 = vunpack.c.0.s8 %v1415
    %v1417 = vlaneseq
    %v1418 = vshrl.u32 %v1417, 7
    %v1419 = vsub.s32 %v1416, %v1418
    %v1420 = vrot.slane %v1413, %v1419
    %v1422 = vunpack.c.l.s4 1966171168
    %v1423 = vunpack.c.0.s8 %v1422
    %v1424 = vlaneseq
    %v1425 = vshrl.u32 %v1424, 7
    %v1426 = vsub.s32 %v1423, %v1425
    %v1427 = vrot.slane %v1420, %v1426
    %v1429 = vlaneseq
    %vm1430 = vcmp.ge.s32.totalorder %v1429, 0
    %vm1431 = vcmp.lt.s32.totalorder %v1429, 256
    %vm1432 = vmand %vm1430, %vm1431
    %1433 = vst.msk [vmem:[#allocation3] sm:$0x3] %vm1432, %v1427
    // Predicated region
    $region46: #{tpu_custom_call.1} parent=1 // pred_check
      _
    $region47: #{tpu_custom_call.1} parent=1 // pred_check_branch
      %1435 = sbr.rel (0) target = $region49
    $region48: #{tpu_custom_call.1} parent=1 // pred_region
      %s1437 = ssub.s32 32, 32
      %1438 = vsyncadd [#allocation4], %s1437
      %s1440 = sshll.u32 [#allocation3], 4
      %s1441 = int_to_ptr.vmem [resolvable:$true] %s1440
      %1443 = dma.vmem_to_hbm [thread:$0]  %s1441, 32, %s11, [#allocation4]
    $region49: #{tpu_custom_call.1} parent=1 // pred_fallthru
      _
    // Predicated region
    $region50: #{tpu_custom_call.1} parent=1 // pred_check
      _
    $region51: #{tpu_custom_call.1} parent=1 // pred_check_branch
      %1445 = sbr.rel (0) target = $region53
    $region52: #{tpu_custom_call.1} parent=1 // pred_region
      %1446 = dma.done [#allocation4], 32
    $region53: #{tpu_custom_call.1} parent=1 // pred_fallthru
      _
    %1447 = vsyncpa [#allocation4], 1

</llo_original>
